<compile_context>
chip_gen: v7x
topology: tpu7x:2x2x1
jax: 0.10.0
libtpu: 0.0.40
codegen_flags: <defaults>
</compile_context>

<pallas_src>
import jax
import jax.numpy as jnp
from jax.experimental import pallas as pl
from jax.experimental.pallas import tpu as pltpu

NDF = 64
C_IN = NDF * 8          # 512
KH = KW = 4             # conv kernel / expected spatial size
K = C_IN * KH * KW      # 8192 reduced elements per batch row

# One resident block up to this batch size (minimum per-step overhead); above it,
# split into >=2 grid steps so both v7x TensorCores are used.
_SINGLE_BLOCK_MAX = 256
_PER_BUFFER_BYTES = 12 * 1024 * 1024   # ~12 MiB activation tile (double-buffered ~24 MiB)


def d_kernel(x_ref, w_ref, o_ref):
    """x_ref: (TN, K) activations (producer dtype), w_ref: (1, K) conv weight,
    o_ref: (1, TN) f32 sigmoid output (lane-dense row).

    Single fused step: bf16 operands (cast in-kernel on the VPU), f32 MXU
    accumulation, sigmoid on the (1, TN) result.
    """
    xb = x_ref[...].astype(jnp.bfloat16)   # VPU cast, hidden under the input DMA
    wb = w_ref[...].astype(jnp.bfloat16)
    # (1, K) x (TN, K) contracting both lane axes -> (1, TN).  Native transposed-RHS
    # MXU matmul (canonical flash-attention TRANS_B form); no XLU transpose of xb.
    logits = jax.lax.dot_general(
        wb, xb,
        dimension_numbers=(((1,), (1,)), ((), ())),
        preferred_element_type=jnp.float32,
    )                                               # (1, TN) f32
    o_ref[...] = 1.0 / (1.0 + jnp.exp(-logits))     # sigmoid (tiny; exp on EUP)


def _round_up(a, b):
    return (a + b - 1) // b * b


def d_forward(x_nchw, weight, *, block_batch=None):
    """weight has PyTorch conv layout (1, C_IN, 4, 4); x is NCHW (N, 512, 4, 4).

    Returns shape (N,) float32 (matches output.view(-1, 1).squeeze(1)).
    `block_batch` optionally forces the batch tile (must be a multiple of 128 or == N).
    """
    N, C, H, W = x_nchw.shape
    assert (C, H, W) == (C_IN, KH, KW), "D expects (N, 512, 4, 4) input"
    assert weight.shape == (1, C_IN, KH, KW)

    # Contiguous reshapes only — keep the producer's dtype, no standalone cast pass.
    x2 = x_nchw.reshape(N, K)          # (N, K), K on the lane axis
    w2 = weight.reshape(1, K)          # (1, K), lane-dense

    if block_batch is not None:
        tn = block_batch
    else:
        itemsize = jnp.dtype(x2.dtype).itemsize
        # Largest lane-aligned batch tile within the per-buffer VMEM budget
        # (384 rows for f32 input, 768 for bf16).
        tn_budget = max(128, (_PER_BUFFER_BYTES // (K * itemsize)) // 128 * 128)
        if N <= _SINGLE_BLOCK_MAX:
            tn = N                     # single step; block dims == full array dims
        else:
            # >=2 grid steps (v7x megacore), tiles a multiple of 128 (lane-dense
            # output blocks), capped by the VMEM budget.
            tn = min(tn_budget, max(128, _round_up(pl.cdiv(N, 2), 128)))

    grid = (pl.cdiv(N, tn),)           # ragged last block: reads padded, writes masked

    out = pl.pallas_call(
        d_kernel,
        out_shape=jax.ShapeDtypeStruct((1, N), jnp.float32),
        grid=grid,
        in_specs=[
            pl.BlockSpec((tn, K), lambda n: (n, 0)),   # batch tile of activations
            pl.BlockSpec((1, K), lambda n: (0, 0)),    # weight resident across steps
        ],
        out_specs=pl.BlockSpec((1, tn), lambda n: (0, n)),  # lane-dense output row
        compiler_params=pltpu.CompilerParams(
            dimension_semantics=("parallel",),
            vmem_limit_bytes=48 * 1024 * 1024,
        ),
    )(x2, w2)

    return out[0]      # (N,), matches output.view(-1, 1).squeeze(1)


def _bf16_ref(x, w):
    """Reference with matching bf16 operand quantization and f32 accumulation."""
    n = x.shape[0]
    xb = x.reshape(n, -1).astype(jnp.bfloat16).astype(jnp.float32)
    wb = w.reshape(1, -1).astype(jnp.bfloat16).astype(jnp.float32)
    logits = jnp.dot(xb, wb.T, precision=jax.lax.Precision.HIGHEST)
    return jax.nn.sigmoid(logits).reshape(-1)


if __name__ == "__main__":
    key = jax.random.PRNGKey(0)
    k_x, k_w, k_x2 = jax.random.split(key, 3)

    # DCGAN-style deterministic init: N(0, 0.02) for the conv weight (1, 512, 4, 4)
    w = 0.02 * jax.random.normal(k_w, (1, C_IN, KH, KW), dtype=jnp.float32)

    # --- primary small case: batch=2, single resident block -----------------------
    N = 2
    x = jax.random.normal(k_x, (N, C_IN, KH, KW), dtype=jnp.float32)
    y = jax.block_until_ready(d_forward(x, w))
    assert y.shape == (N,)
    assert jnp.allclose(y, _bf16_ref(x, w), atol=1e-5, rtol=1e-5)
    # Sanity vs. full-f32 PyTorch math (bf16 operands in-kernel => looser tolerance).
    ref_f32 = jax.nn.sigmoid(
        jnp.dot(x.reshape(N, -1), w.reshape(1, -1).T,
                precision=jax.lax.Precision.HIGHEST)).reshape(-1)
    assert jnp.allclose(y, ref_f32, atol=2e-2)

    # --- secondary case: multi-step grid with a ragged (masked) last block ---------
    N2 = 130
    x_big = jax.random.normal(k_x2, (N2, C_IN, KH, KW), dtype=jnp.float32)
    y_big = jax.block_until_ready(d_forward(x_big, w, block_batch=128))  # grid=(2,)
    assert y_big.shape == (N2,)
    assert jnp.allclose(y_big, _bf16_ref(x_big, w), atol=1e-5, rtol=1e-5)

    print("KERNEL_OK")
</pallas_src>

<mosaic_0001>
module attributes {stable_mosaic.version = 11 : i64} {
  func.func @d_kernel(%arg0: i32, %arg1: memref<2x8192xf32, #tpu.memory_space<vmem>>, %arg2: memref<1x8192xf32, #tpu.memory_space<vmem>>, %arg3: memref<1x2xf32, #tpu.memory_space<vmem>>) attributes {dimension_semantics = [#tpu.dimension_semantics<parallel>], iteration_bounds = array<i64: 1>, scalar_prefetch = 0 : i64, scratch_operands = 0 : i64, tpu.core_type = #tpu.core_type<tc>, window_params = [{transform_indices = @transform_0, window_bounds = array<i64: 2, 8192>}, {pipeline_mode = #tpu.pipeline_mode<synchronous>, transform_indices = @transform_1, window_bounds = array<i64: 1, 8192>}, {transform_indices = @transform_2, window_bounds = array<i64: 1, 2>}]} {
    %c0 = arith.constant 0 : index
    %c0_0 = arith.constant 0 : index
    %0 = vector.load %arg1[%c0, %c0_0] : memref<2x8192xf32, #tpu.memory_space<vmem>>, vector<2x8192xf32>
    %1 = arith.truncf %0 : vector<2x8192xf32> to vector<2x8192xbf16>
    %c0_1 = arith.constant 0 : index
    %c0_2 = arith.constant 0 : index
    %2 = vector.load %arg2[%c0_1, %c0_2] : memref<1x8192xf32, #tpu.memory_space<vmem>>, vector<1x8192xf32>
    %3 = arith.truncf %2 : vector<1x8192xf32> to vector<1x8192xbf16>
    %cst = arith.constant dense<0.000000e+00> : vector<1x2xf32>
    %4 = tpu.matmul %3, %1, %cst {dimension_numbers = #tpu.dot_dimension_numbers<[1], [1], [0], [0], [0, 0, 1, 0], [], []>} : vector<1x8192xbf16>, vector<2x8192xbf16>, vector<1x2xf32> -> vector<1x2xf32>
    %cst_3 = arith.constant 0.000000e+00 : f32
    %5 = vector.broadcast %cst_3 : f32 to vector<1x2xf32>
    %6 = arith.subf %5, %4 : vector<1x2xf32>
    %7 = math.exp %6 : vector<1x2xf32>
    %cst_4 = arith.constant 1.000000e+00 : f32
    %8 = vector.broadcast %cst_4 : f32 to vector<1x2xf32>
    %9 = arith.addf %8, %7 : vector<1x2xf32>
    %cst_5 = arith.constant 1.000000e+00 : f32
    %10 = vector.broadcast %cst_5 : f32 to vector<1x2xf32>
    %11 = arith.divf %10, %9 : vector<1x2xf32>
    %c0_6 = arith.constant 0 : index
    %c0_7 = arith.constant 0 : index
    %12 = vector.load %arg3[%c0_6, %c0_7] : memref<1x2xf32, #tpu.memory_space<vmem>>, vector<1x2xf32>
    tpu.vector_store %arg3[%c0_6, %c0_7], %11 {strides = array<i32>} : memref<1x2xf32, #tpu.memory_space<vmem>>, vector<1x2xf32>,
    return
  }
  func.func @transform_0(%arg0: i32) -> (i32, i32) {
    %c0_i32 = arith.constant 0 : i32
    %c0_i32_0 = arith.constant 0 : i32
    return %arg0, %c0_i32 : i32, i32
  }
  func.func @transform_1(%arg0: i32) -> (i32, i32) {
    %c0_i32 = arith.constant 0 : i32
    %c0_i32_0 = arith.constant 0 : i32
    %c0_i32_1 = arith.constant 0 : i32
    return %c0_i32, %c0_i32_0 : i32, i32
  }
  func.func @transform_2(%arg0: i32) -> (i32, i32) {
    %c0_i32 = arith.constant 0 : i32
    %c0_i32_0 = arith.constant 0 : i32
    return %c0_i32, %arg0 : i32, i32
  }
}

</mosaic_0001>

<llo_original>
// kernel: tpu_custom_call.1
$region0: #{tpu_custom_call.1}
  #allocation0 [shape = 'u32[]', space=smem, size = 0x4, offset = 0x4, fixed_abs, tag = 'smem constant byte address 0x4 - core index']
  #allocation1 [shape = 'u32[144,128]{1,0:T(1,128)}', space=vmem, size = 0x12000, scoped, tag = 'internal scratch']
  %s0 = inlined_call_operand.hbm [shape: f32[2,8192], index: 0, kind: input, shape index: {}]
  %s1 = inlined_call_operand.hbm [shape: f32[1,8192], index: 1, kind: input, shape index: {}]
  %s2 = inlined_call_operand.hbm [shape: f32[1,2], index: 2, kind: output, shape index: {}]
  %s3 = sld [smem:[#allocation0]]
  $region26: #{tpu_custom_call.1} parent=0
    _
  %s5 = ssub.s32 1, %s3
  %s6 = scalar_select 0, %s5, %s3
  $region1: #{tpu_custom_call.1} parent=0
    #allocation2 [shape = 'u8[65536]{0}', space=vmem, size = 0x10000, scoped, tag = 'input window, operand 0, single buffered']
    #allocation3 [shape = 's32[1]{0}', space=sflag, size = 0x4, scoped, tag = 'scoped memory for tpu_custom_call.1']
    #allocation4 [shape = 's32[1]{0}', space=sflag, size = 0x4, scoped, tag = 'scoped memory for tpu_custom_call.1']
    #allocation5 [shape = 'u8[32768]{0}', space=vmem, size = 0x8000, scoped, tag = 'input window, operand 1, single buffered']
    #allocation6 [shape = 's32[1]{0}', space=sflag, size = 0x4, scoped, tag = 'scoped memory for tpu_custom_call.1']
    #allocation7 [shape = 'u8[512]{0}', space=vmem, size = 0x400, scoped, tag = 'output window, operand 0, single buffered']
    %7 = vsyncpa [#allocation3], 0
    %8 = vsyncpa [#allocation6], 0
    %9 = vsyncpa [#allocation4], 0
    // Predicated region
    $region2: #{tpu_custom_call.1} parent=1 // pred_check
      _
    $region3: #{tpu_custom_call.1} parent=1 // pred_check_branch
      %11 = sbr.rel (0) target = $region5
    $region4: #{tpu_custom_call.1} parent=1 // pred_region
      %s13 = ssub.s32 2048, 2048
      %14 = vsyncadd [#allocation3], %s13
      %s16 = sshll.u32 [#allocation2], 4
      %s17 = int_to_ptr.vmem [resolvable:$true] %s16
      %19 = dma.hbm_to_vmem [thread:$0]  %s0, 2048, %s17, [#allocation3]
    $region5: #{tpu_custom_call.1} parent=1 // pred_fallthru
      _
    // Predicated region
    $region6: #{tpu_custom_call.1} parent=1 // pred_check
      _
    $region7: #{tpu_custom_call.1} parent=1 // pred_check_branch
      %21 = sbr.rel (0) target = $region9
    $region8: #{tpu_custom_call.1} parent=1 // pred_region
      %s23 = ssub.s32 1024, 1024
      %24 = vsyncadd [#allocation6], %s23
      %s26 = sshll.u32 [#allocation5], 4
      %s27 = int_to_ptr.vmem [resolvable:$true] %s26
      %29 = dma.hbm_to_vmem [thread:$0]  %s1, 1024, %s27, [#allocation6]
    $region9: #{tpu_custom_call.1} parent=1 // pred_fallthru
      _
    // Predicated region
    $region10: #{tpu_custom_call.1} parent=1 // pred_check
      _
    $region11: #{tpu_custom_call.1} parent=1 // pred_check_branch
      %31 = sbr.rel (0) target = $region13
    $region12: #{tpu_custom_call.1} parent=1 // pred_region
      %32 = dma.done [#allocation3], 2048
    $region13: #{tpu_custom_call.1} parent=1 // pred_fallthru
      _
    // Predicated region
    $region14: #{tpu_custom_call.1} parent=1 // pred_check
      _
    $region15: #{tpu_custom_call.1} parent=1 // pred_check_branch
      %34 = sbr.rel (0) target = $region17
    $region16: #{tpu_custom_call.1} parent=1 // pred_region
      %35 = dma.done [#allocation6], 1024
    $region17: #{tpu_custom_call.1} parent=1 // pred_fallthru
      _
    %v37 = vld [vmem:[#allocation2] sm:$0xff]
    %v38 = vld [vmem:[#allocation2 + $0x8] sm:$0xff]
    %v39 = vld [vmem:[#allocation2 + $0x10] sm:$0xff]
    %v40 = vld [vmem:[#allocation2 + $0x18] sm:$0xff]
    %v41 = vld [vmem:[#allocation2 + $0x20] sm:$0xff]
    %v42 = vld [vmem:[#allocation2 + $0x28] sm:$0xff]
    %v43 = vld [vmem:[#allocation2 + $0x30] sm:$0xff]
    %v44 = vld [vmem:[#allocation2 + $0x38] sm:$0xff]
    %v45 = vld [vmem:[#allocation2 + $0x40] sm:$0xff]
    %v46 = vld [vmem:[#allocation2 + $0x48] sm:$0xff]
    %v47 = vld [vmem:[#allocation2 + $0x50] sm:$0xff]
    %v48 = vld [vmem:[#allocation2 + $0x58] sm:$0xff]
    %v49 = vld [vmem:[#allocation2 + $0x60] sm:$0xff]
    %v50 = vld [vmem:[#allocation2 + $0x68] sm:$0xff]
    %v51 = vld [vmem:[#allocation2 + $0x70] sm:$0xff]
    %v52 = vld [vmem:[#allocation2 + $0x78] sm:$0xff]
    %v69 = vcombine.high %v37, %v37
    %v71 = vunpack.c.l.s4 1983009808
    %v72 = vunpack.c.0.s8 %v71
    %v73 = vlaneseq
    %v74 = vshrl.u32 %v73, 7
    %v75 = vsub.s32 %v72, %v74
    %v76 = vrot.slane %v37, %v75
    %v78 = vunpack.c.l.s4 1983009808
    %v79 = vunpack.c.0.s8 %v78
    %v80 = vlaneseq
    %v81 = vshrl.u32 %v80, 7
    %v82 = vsub.s32 %v79, %v81
    %v83 = vrot.slane %v69, %v82
    %v84 = vcombine.high %v76, %v76
    %v85 = vcombine.high %v83, %v83
    %v86 = vcombine.high %v38, %v38
    %v88 = vunpack.c.l.s4 1983009808
    %v89 = vunpack.c.0.s8 %v88
    %v90 = vlaneseq
    %v91 = vshrl.u32 %v90, 7
    %v92 = vsub.s32 %v89, %v91
    %v93 = vrot.slane %v38, %v92
    %v95 = vunpack.c.l.s4 1983009808
    %v96 = vunpack.c.0.s8 %v95
    %v97 = vlaneseq
    %v98 = vshrl.u32 %v97, 7
    %v99 = vsub.s32 %v96, %v98
    %v100 = vrot.slane %v86, %v99
    %v101 = vcombine.high %v93, %v93
    %v102 = vcombine.high %v100, %v100
    %v103 = vcombine.high %v39, %v39
    %v105 = vunpack.c.l.s4 1983009808
    %v106 = vunpack.c.0.s8 %v105
    %v107 = vlaneseq
    %v108 = vshrl.u32 %v107, 7
    %v109 = vsub.s32 %v106, %v108
    %v110 = vrot.slane %v39, %v109
    %v112 = vunpack.c.l.s4 1983009808
    %v113 = vunpack.c.0.s8 %v112
    %v114 = vlaneseq
    %v115 = vshrl.u32 %v114, 7
    %v116 = vsub.s32 %v113, %v115
    %v117 = vrot.slane %v103, %v116
    %v118 = vcombine.high %v110, %v110
    %v119 = vcombine.high %v117, %v117
    %v120 = vcombine.high %v40, %v40
    %v122 = vunpack.c.l.s4 1983009808
    %v123 = vunpack.c.0.s8 %v122
    %v124 = vlaneseq
    %v125 = vshrl.u32 %v124, 7
    %v126 = vsub.s32 %v123, %v125
    %v127 = vrot.slane %v40, %v126
    %v129 = vunpack.c.l.s4 1983009808
    %v130 = vunpack.c.0.s8 %v129
    %v131 = vlaneseq
    %v132 = vshrl.u32 %v131, 7
    %v133 = vsub.s32 %v130, %v132
    %v134 = vrot.slane %v120, %v133
    %v135 = vcombine.high %v127, %v127
    %v136 = vcombine.high %v134, %v134
    %v137 = vcombine.high %v41, %v41
    %v139 = vunpack.c.l.s4 1983009808
    %v140 = vunpack.c.0.s8 %v139
    %v141 = vlaneseq
    %v142 = vshrl.u32 %v141, 7
    %v143 = vsub.s32 %v140, %v142
    %v144 = vrot.slane %v41, %v143
    %v146 = vunpack.c.l.s4 1983009808
    %v147 = vunpack.c.0.s8 %v146
    %v148 = vlaneseq
    %v149 = vshrl.u32 %v148, 7
    %v150 = vsub.s32 %v147, %v149
    %v151 = vrot.slane %v137, %v150
    %v152 = vcombine.high %v144, %v144
    %v153 = vcombine.high %v151, %v151
    %v154 = vcombine.high %v42, %v42
    %v156 = vunpack.c.l.s4 1983009808
    %v157 = vunpack.c.0.s8 %v156
    %v158 = vlaneseq
    %v159 = vshrl.u32 %v158, 7
    %v160 = vsub.s32 %v157, %v159
    %v161 = vrot.slane %v42, %v160
    %v163 = vunpack.c.l.s4 1983009808
    %v164 = vunpack.c.0.s8 %v163
    %v165 = vlaneseq
    %v166 = vshrl.u32 %v165, 7
    %v167 = vsub.s32 %v164, %v166
    %v168 = vrot.slane %v154, %v167
    %v169 = vcombine.high %v161, %v161
    %v170 = vcombine.high %v168, %v168
    %v171 = vcombine.high %v43, %v43
    %v173 = vunpack.c.l.s4 1983009808
    %v174 = vunpack.c.0.s8 %v173
    %v175 = vlaneseq
    %v176 = vshrl.u32 %v175, 7
    %v177 = vsub.s32 %v174, %v176
    %v178 = vrot.slane %v43, %v177
    %v180 = vunpack.c.l.s4 1983009808
    %v181 = vunpack.c.0.s8 %v180
    %v182 = vlaneseq
    %v183 = vshrl.u32 %v182, 7
    %v184 = vsub.s32 %v181, %v183
    %v185 = vrot.slane %v171, %v184
    %v186 = vcombine.high %v178, %v178
    %v187 = vcombine.high %v185, %v185
    %v188 = vcombine.high %v44, %v44
    %v190 = vunpack.c.l.s4 1983009808
    %v191 = vunpack.c.0.s8 %v190
    %v192 = vlaneseq
    %v193 = vshrl.u32 %v192, 7
    %v194 = vsub.s32 %v191, %v193
    %v195 = vrot.slane %v44, %v194
    %v197 = vunpack.c.l.s4 1983009808
    %v198 = vunpack.c.0.s8 %v197
    %v199 = vlaneseq
    %v200 = vshrl.u32 %v199, 7
    %v201 = vsub.s32 %v198, %v200
    %v202 = vrot.slane %v188, %v201
    %v203 = vcombine.high %v195, %v195
    %v204 = vcombine.high %v202, %v202
    %v205 = vcombine.high %v45, %v45
    %v207 = vunpack.c.l.s4 1983009808
    %v208 = vunpack.c.0.s8 %v207
    %v209 = vlaneseq
    %v210 = vshrl.u32 %v209, 7
    %v211 = vsub.s32 %v208, %v210
    %v212 = vrot.slane %v45, %v211
    %v214 = vunpack.c.l.s4 1983009808
    %v215 = vunpack.c.0.s8 %v214
    %v216 = vlaneseq
    %v217 = vshrl.u32 %v216, 7
    %v218 = vsub.s32 %v215, %v217
    %v219 = vrot.slane %v205, %v218
    %v220 = vcombine.high %v212, %v212
    %v221 = vcombine.high %v219, %v219
    %v222 = vcombine.high %v46, %v46
    %v224 = vunpack.c.l.s4 1983009808
    %v225 = vunpack.c.0.s8 %v224
    %v226 = vlaneseq
    %v227 = vshrl.u32 %v226, 7
    %v228 = vsub.s32 %v225, %v227
    %v229 = vrot.slane %v46, %v228
    %v231 = vunpack.c.l.s4 1983009808
    %v232 = vunpack.c.0.s8 %v231
    %v233 = vlaneseq
    %v234 = vshrl.u32 %v233, 7
    %v235 = vsub.s32 %v232, %v234
    %v236 = vrot.slane %v222, %v235
    %v237 = vcombine.high %v229, %v229
    %v238 = vcombine.high %v236, %v236
    %v239 = vcombine.high %v47, %v47
    %v241 = vunpack.c.l.s4 1983009808
    %v242 = vunpack.c.0.s8 %v241
    %v243 = vlaneseq
    %v244 = vshrl.u32 %v243, 7
    %v245 = vsub.s32 %v242, %v244
    %v246 = vrot.slane %v47, %v245
    %v248 = vunpack.c.l.s4 1983009808
    %v249 = vunpack.c.0.s8 %v248
    %v250 = vlaneseq
    %v251 = vshrl.u32 %v250, 7
    %v252 = vsub.s32 %v249, %v251
    %v253 = vrot.slane %v239, %v252
    %v254 = vcombine.high %v246, %v246
    %v255 = vcombine.high %v253, %v253
    %v256 = vcombine.high %v48, %v48
    %v258 = vunpack.c.l.s4 1983009808
    %v259 = vunpack.c.0.s8 %v258
    %v260 = vlaneseq
    %v261 = vshrl.u32 %v260, 7
    %v262 = vsub.s32 %v259, %v261
    %v263 = vrot.slane %v48, %v262
    %v265 = vunpack.c.l.s4 1983009808
    %v266 = vunpack.c.0.s8 %v265
    %v267 = vlaneseq
    %v268 = vshrl.u32 %v267, 7
    %v269 = vsub.s32 %v266, %v268
    %v270 = vrot.slane %v256, %v269
    %v271 = vcombine.high %v263, %v263
    %v272 = vcombine.high %v270, %v270
    %v273 = vcombine.high %v49, %v49
    %v275 = vunpack.c.l.s4 1983009808
    %v276 = vunpack.c.0.s8 %v275
    %v277 = vlaneseq
    %v278 = vshrl.u32 %v277, 7
    %v279 = vsub.s32 %v276, %v278
    %v280 = vrot.slane %v49, %v279
    %v282 = vunpack.c.l.s4 1983009808
    %v283 = vunpack.c.0.s8 %v282
    %v284 = vlaneseq
    %v285 = vshrl.u32 %v284, 7
    %v286 = vsub.s32 %v283, %v285
    %v287 = vrot.slane %v273, %v286
    %v288 = vcombine.high %v280, %v280
    %v289 = vcombine.high %v287, %v287
    %v290 = vcombine.high %v50, %v50
    %v292 = vunpack.c.l.s4 1983009808
    %v293 = vunpack.c.0.s8 %v292
    %v294 = vlaneseq
    %v295 = vshrl.u32 %v294, 7
    %v296 = vsub.s32 %v293, %v295
    %v297 = vrot.slane %v50, %v296
    %v299 = vunpack.c.l.s4 1983009808
    %v300 = vunpack.c.0.s8 %v299
    %v301 = vlaneseq
    %v302 = vshrl.u32 %v301, 7
    %v303 = vsub.s32 %v300, %v302
    %v304 = vrot.slane %v290, %v303
    %v305 = vcombine.high %v297, %v297
    %v306 = vcombine.high %v304, %v304
    %v307 = vcombine.high %v51, %v51
    %v309 = vunpack.c.l.s4 1983009808
    %v310 = vunpack.c.0.s8 %v309
    %v311 = vlaneseq
    %v312 = vshrl.u32 %v311, 7
    %v313 = vsub.s32 %v310, %v312
    %v314 = vrot.slane %v51, %v313
    %v316 = vunpack.c.l.s4 1983009808
    %v317 = vunpack.c.0.s8 %v316
    %v318 = vlaneseq
    %v319 = vshrl.u32 %v318, 7
    %v320 = vsub.s32 %v317, %v319
    %v321 = vrot.slane %v307, %v320
    %v322 = vcombine.high %v314, %v314
    %v323 = vcombine.high %v321, %v321
    %v324 = vcombine.high %v52, %v52
    %v326 = vunpack.c.l.s4 1983009808
    %v327 = vunpack.c.0.s8 %v326
    %v328 = vlaneseq
    %v329 = vshrl.u32 %v328, 7
    %v330 = vsub.s32 %v327, %v329
    %v331 = vrot.slane %v52, %v330
    %v333 = vunpack.c.l.s4 1983009808
    %v334 = vunpack.c.0.s8 %v333
    %v335 = vlaneseq
    %v336 = vshrl.u32 %v335, 7
    %v337 = vsub.s32 %v334, %v336
    %v338 = vrot.slane %v324, %v337
    %v339 = vcombine.high %v331, %v331
    %v340 = vcombine.high %v338, %v338
    %v405 = vpack.c.bf16 %v76, %v76
    %v406 = vpack.c.bf16 %v84, %v84
    %v407 = vpack.c.bf16 %v83, %v83
    %v408 = vpack.c.bf16 %v85, %v85
    %v409 = vpack.c.bf16 %v93, %v93
    %v410 = vpack.c.bf16 %v101, %v101
    %v411 = vpack.c.bf16 %v100, %v100
    %v412 = vpack.c.bf16 %v102, %v102
    %v413 = vpack.c.bf16 %v110, %v110
    %v414 = vpack.c.bf16 %v118, %v118
    %v415 = vpack.c.bf16 %v117, %v117
    %v416 = vpack.c.bf16 %v119, %v119
    %v417 = vpack.c.bf16 %v127, %v127
    %v418 = vpack.c.bf16 %v135, %v135
    %v419 = vpack.c.bf16 %v134, %v134
    %v420 = vpack.c.bf16 %v136, %v136
    %v421 = vpack.c.bf16 %v144, %v144
    %v422 = vpack.c.bf16 %v152, %v152
    %v423 = vpack.c.bf16 %v151, %v151
    %v424 = vpack.c.bf16 %v153, %v153
    %v425 = vpack.c.bf16 %v161, %v161
    %v426 = vpack.c.bf16 %v169, %v169
    %v427 = vpack.c.bf16 %v168, %v168
    %v428 = vpack.c.bf16 %v170, %v170
    %v429 = vpack.c.bf16 %v178, %v178
    %v430 = vpack.c.bf16 %v186, %v186
    %v431 = vpack.c.bf16 %v185, %v185
    %v432 = vpack.c.bf16 %v187, %v187
    %v433 = vpack.c.bf16 %v195, %v195
    %v434 = vpack.c.bf16 %v203, %v203
    %v435 = vpack.c.bf16 %v202, %v202
    %v436 = vpack.c.bf16 %v204, %v204
    %v437 = vpack.c.bf16 %v212, %v212
    %v438 = vpack.c.bf16 %v220, %v220
    %v439 = vpack.c.bf16 %v219, %v219
    %v440 = vpack.c.bf16 %v221, %v221
    %v441 = vpack.c.bf16 %v229, %v229
    %v442 = vpack.c.bf16 %v237, %v237
    %v443 = vpack.c.bf16 %v236, %v236
    %v444 = vpack.c.bf16 %v238, %v238
    %v445 = vpack.c.bf16 %v246, %v246
    %v446 = vpack.c.bf16 %v254, %v254
    %v447 = vpack.c.bf16 %v253, %v253
    %v448 = vpack.c.bf16 %v255, %v255
    %v449 = vpack.c.bf16 %v263, %v263
    %v450 = vpack.c.bf16 %v271, %v271
    %v451 = vpack.c.bf16 %v270, %v270
    %v452 = vpack.c.bf16 %v272, %v272
    %v453 = vpack.c.bf16 %v280, %v280
    %v454 = vpack.c.bf16 %v288, %v288
    %v455 = vpack.c.bf16 %v287, %v287
    %v456 = vpack.c.bf16 %v289, %v289
    %v457 = vpack.c.bf16 %v297, %v297
    %v458 = vpack.c.bf16 %v305, %v305
    %v459 = vpack.c.bf16 %v304, %v304
    %v460 = vpack.c.bf16 %v306, %v306
    %v461 = vpack.c.bf16 %v314, %v314
    %v462 = vpack.c.bf16 %v322, %v322
    %v463 = vpack.c.bf16 %v321, %v321
    %v464 = vpack.c.bf16 %v323, %v323
    %v465 = vpack.c.bf16 %v331, %v331
    %v466 = vpack.c.bf16 %v339, %v339
    %v467 = vpack.c.bf16 %v338, %v338
    %v468 = vpack.c.bf16 %v340, %v340
    %v469 = vld [vmem:[#allocation5] sm:$0xff]
    %v470 = vld [vmem:[#allocation5 + $0x8] sm:$0xff]
    %v471 = vld [vmem:[#allocation5 + $0x10] sm:$0xff]
    %v472 = vld [vmem:[#allocation5 + $0x18] sm:$0xff]
    %v473 = vld [vmem:[#allocation5 + $0x20] sm:$0xff]
    %v474 = vld [vmem:[#allocation5 + $0x28] sm:$0xff]
    %v475 = vld [vmem:[#allocation5 + $0x30] sm:$0xff]
    %v476 = vld [vmem:[#allocation5 + $0x38] sm:$0xff]
    %v485 = vlaneseq
    %v486 = vshrl.u32 %v485, 7
    %v487 = vsub.s32 0, %v486
    %v488 = vrot.slane %v469, %v487
    %v489 = vlaneseq
    %v490 = vshrl.u32 %v489, 7
    %v491 = vsub.s32 1, %v490
    %v492 = vrot.slane %v469, %v491
    %v493 = vlaneseq
    %v494 = vshrl.u32 %v493, 7
    %v495 = vsub.s32 2, %v494
    %v496 = vrot.slane %v469, %v495
    %v497 = vlaneseq
    %v498 = vshrl.u32 %v497, 7
    %v499 = vsub.s32 3, %v498
    %v500 = vrot.slane %v469, %v499
    %v501 = vlaneseq
    %v502 = vshrl.u32 %v501, 7
    %v503 = vsub.s32 4, %v502
    %v504 = vrot.slane %v469, %v503
    %v505 = vlaneseq
    %v506 = vshrl.u32 %v505, 7
    %v507 = vsub.s32 5, %v506
    %v508 = vrot.slane %v469, %v507
    %v509 = vlaneseq
    %v510 = vshrl.u32 %v509, 7
    %v511 = vsub.s32 6, %v510
    %v512 = vrot.slane %v469, %v511
    %v513 = vlaneseq
    %v514 = vshrl.u32 %v513, 7
    %v515 = vsub.s32 7, %v514
    %v516 = vrot.slane %v469, %v515
    %v517 = vlaneseq
    %v518 = vshrl.u32 %v517, 7
    %v519 = vsub.s32 0, %v518
    %v520 = vrot.slane %v470, %v519
    %v521 = vlaneseq
    %v522 = vshrl.u32 %v521, 7
    %v523 = vsub.s32 1, %v522
    %v524 = vrot.slane %v470, %v523
    %v525 = vlaneseq
    %v526 = vshrl.u32 %v525, 7
    %v527 = vsub.s32 2, %v526
    %v528 = vrot.slane %v470, %v527
    %v529 = vlaneseq
    %v530 = vshrl.u32 %v529, 7
    %v531 = vsub.s32 3, %v530
    %v532 = vrot.slane %v470, %v531
    %v533 = vlaneseq
    %v534 = vshrl.u32 %v533, 7
    %v535 = vsub.s32 4, %v534
    %v536 = vrot.slane %v470, %v535
    %v537 = vlaneseq
    %v538 = vshrl.u32 %v537, 7
    %v539 = vsub.s32 5, %v538
    %v540 = vrot.slane %v470, %v539
    %v541 = vlaneseq
    %v542 = vshrl.u32 %v541, 7
    %v543 = vsub.s32 6, %v542
    %v544 = vrot.slane %v470, %v543
    %v545 = vlaneseq
    %v546 = vshrl.u32 %v545, 7
    %v547 = vsub.s32 7, %v546
    %v548 = vrot.slane %v470, %v547
    %v549 = vlaneseq
    %v550 = vshrl.u32 %v549, 7
    %v551 = vsub.s32 0, %v550
    %v552 = vrot.slane %v471, %v551
    %v553 = vlaneseq
    %v554 = vshrl.u32 %v553, 7
    %v555 = vsub.s32 1, %v554
    %v556 = vrot.slane %v471, %v555
    %v557 = vlaneseq
    %v558 = vshrl.u32 %v557, 7
    %v559 = vsub.s32 2, %v558
    %v560 = vrot.slane %v471, %v559
    %v561 = vlaneseq
    %v562 = vshrl.u32 %v561, 7
    %v563 = vsub.s32 3, %v562
    %v564 = vrot.slane %v471, %v563
    %v565 = vlaneseq
    %v566 = vshrl.u32 %v565, 7
    %v567 = vsub.s32 4, %v566
    %v568 = vrot.slane %v471, %v567
    %v569 = vlaneseq
    %v570 = vshrl.u32 %v569, 7
    %v571 = vsub.s32 5, %v570
    %v572 = vrot.slane %v471, %v571
    %v573 = vlaneseq
    %v574 = vshrl.u32 %v573, 7
    %v575 = vsub.s32 6, %v574
    %v576 = vrot.slane %v471, %v575
    %v577 = vlaneseq
    %v578 = vshrl.u32 %v577, 7
    %v579 = vsub.s32 7, %v578
    %v580 = vrot.slane %v471, %v579
    %v581 = vlaneseq
    %v582 = vshrl.u32 %v581, 7
    %v583 = vsub.s32 0, %v582
    %v584 = vrot.slane %v472, %v583
    %v585 = vlaneseq
    %v586 = vshrl.u32 %v585, 7
    %v587 = vsub.s32 1, %v586
    %v588 = vrot.slane %v472, %v587
    %v589 = vlaneseq
    %v590 = vshrl.u32 %v589, 7
    %v591 = vsub.s32 2, %v590
    %v592 = vrot.slane %v472, %v591
    %v593 = vlaneseq
    %v594 = vshrl.u32 %v593, 7
    %v595 = vsub.s32 3, %v594
    %v596 = vrot.slane %v472, %v595
    %v597 = vlaneseq
    %v598 = vshrl.u32 %v597, 7
    %v599 = vsub.s32 4, %v598
    %v600 = vrot.slane %v472, %v599
    %v601 = vlaneseq
    %v602 = vshrl.u32 %v601, 7
    %v603 = vsub.s32 5, %v602
    %v604 = vrot.slane %v472, %v603
    %v605 = vlaneseq
    %v606 = vshrl.u32 %v605, 7
    %v607 = vsub.s32 6, %v606
    %v608 = vrot.slane %v472, %v607
    %v609 = vlaneseq
    %v610 = vshrl.u32 %v609, 7
    %v611 = vsub.s32 7, %v610
    %v612 = vrot.slane %v472, %v611
    %v613 = vlaneseq
    %v614 = vshrl.u32 %v613, 7
    %v615 = vsub.s32 0, %v614
    %v616 = vrot.slane %v473, %v615
    %v617 = vlaneseq
    %v618 = vshrl.u32 %v617, 7
    %v619 = vsub.s32 1, %v618
    %v620 = vrot.slane %v473, %v619
    %v621 = vlaneseq
    %v622 = vshrl.u32 %v621, 7
    %v623 = vsub.s32 2, %v622
    %v624 = vrot.slane %v473, %v623
    %v625 = vlaneseq
    %v626 = vshrl.u32 %v625, 7
    %v627 = vsub.s32 3, %v626
    %v628 = vrot.slane %v473, %v627
    %v629 = vlaneseq
    %v630 = vshrl.u32 %v629, 7
    %v631 = vsub.s32 4, %v630
    %v632 = vrot.slane %v473, %v631
    %v633 = vlaneseq
    %v634 = vshrl.u32 %v633, 7
    %v635 = vsub.s32 5, %v634
    %v636 = vrot.slane %v473, %v635
    %v637 = vlaneseq
    %v638 = vshrl.u32 %v637, 7
    %v639 = vsub.s32 6, %v638
    %v640 = vrot.slane %v473, %v639
    %v641 = vlaneseq
    %v642 = vshrl.u32 %v641, 7
    %v643 = vsub.s32 7, %v642
    %v644 = vrot.slane %v473, %v643
    %v645 = vlaneseq
    %v646 = vshrl.u32 %v645, 7
    %v647 = vsub.s32 0, %v646
    %v648 = vrot.slane %v474, %v647
    %v649 = vlaneseq
    %v650 = vshrl.u32 %v649, 7
    %v651 = vsub.s32 1, %v650
    %v652 = vrot.slane %v474, %v651
    %v653 = vlaneseq
    %v654 = vshrl.u32 %v653, 7
    %v655 = vsub.s32 2, %v654
    %v656 = vrot.slane %v474, %v655
    %v657 = vlaneseq
    %v658 = vshrl.u32 %v657, 7
    %v659 = vsub.s32 3, %v658
    %v660 = vrot.slane %v474, %v659
    %v661 = vlaneseq
    %v662 = vshrl.u32 %v661, 7
    %v663 = vsub.s32 4, %v662
    %v664 = vrot.slane %v474, %v663
    %v665 = vlaneseq
    %v666 = vshrl.u32 %v665, 7
    %v667 = vsub.s32 5, %v666
    %v668 = vrot.slane %v474, %v667
    %v669 = vlaneseq
    %v670 = vshrl.u32 %v669, 7
    %v671 = vsub.s32 6, %v670
    %v672 = vrot.slane %v474, %v671
    %v673 = vlaneseq
    %v674 = vshrl.u32 %v673, 7
    %v675 = vsub.s32 7, %v674
    %v676 = vrot.slane %v474, %v675
    %v677 = vlaneseq
    %v678 = vshrl.u32 %v677, 7
    %v679 = vsub.s32 0, %v678
    %v680 = vrot.slane %v475, %v679
    %v681 = vlaneseq
    %v682 = vshrl.u32 %v681, 7
    %v683 = vsub.s32 1, %v682
    %v684 = vrot.slane %v475, %v683
    %v685 = vlaneseq
    %v686 = vshrl.u32 %v685, 7
    %v687 = vsub.s32 2, %v686
    %v688 = vrot.slane %v475, %v687
    %v689 = vlaneseq
    %v690 = vshrl.u32 %v689, 7
    %v691 = vsub.s32 3, %v690
    %v692 = vrot.slane %v475, %v691
    %v693 = vlaneseq
    %v694 = vshrl.u32 %v693, 7
    %v695 = vsub.s32 4, %v694
    %v696 = vrot.slane %v475, %v695
    %v697 = vlaneseq
    %v698 = vshrl.u32 %v697, 7
    %v699 = vsub.s32 5, %v698
    %v700 = vrot.slane %v475, %v699
    %v701 = vlaneseq
    %v702 = vshrl.u32 %v701, 7
    %v703 = vsub.s32 6, %v702
    %v704 = vrot.slane %v475, %v703
    %v705 = vlaneseq
    %v706 = vshrl.u32 %v705, 7
    %v707 = vsub.s32 7, %v706
    %v708 = vrot.slane %v475, %v707
    %v709 = vlaneseq
    %v710 = vshrl.u32 %v709, 7
    %v711 = vsub.s32 0, %v710
    %v712 = vrot.slane %v476, %v711
    %v713 = vlaneseq
    %v714 = vshrl.u32 %v713, 7
    %v715 = vsub.s32 1, %v714
    %v716 = vrot.slane %v476, %v715
    %v717 = vlaneseq
    %v718 = vshrl.u32 %v717, 7
    %v719 = vsub.s32 2, %v718
    %v720 = vrot.slane %v476, %v719
    %v721 = vlaneseq
    %v722 = vshrl.u32 %v721, 7
    %v723 = vsub.s32 3, %v722
    %v724 = vrot.slane %v476, %v723
    %v725 = vlaneseq
    %v726 = vshrl.u32 %v725, 7
    %v727 = vsub.s32 4, %v726
    %v728 = vrot.slane %v476, %v727
    %v729 = vlaneseq
    %v730 = vshrl.u32 %v729, 7
    %v731 = vsub.s32 5, %v730
    %v732 = vrot.slane %v476, %v731
    %v733 = vlaneseq
    %v734 = vshrl.u32 %v733, 7
    %v735 = vsub.s32 6, %v734
    %v736 = vrot.slane %v476, %v735
    %v737 = vlaneseq
    %v738 = vshrl.u32 %v737, 7
    %v739 = vsub.s32 7, %v738
    %v740 = vrot.slane %v476, %v739
    %v805 = vpack.c.bf16 %v488, %v488
    %v806 = vpack.c.bf16 %v492, %v492
    %v807 = vpack.c.bf16 %v496, %v496
    %v808 = vpack.c.bf16 %v500, %v500
    %v809 = vpack.c.bf16 %v504, %v504
    %v810 = vpack.c.bf16 %v508, %v508
    %v811 = vpack.c.bf16 %v512, %v512
    %v812 = vpack.c.bf16 %v516, %v516
    %v813 = vpack.c.bf16 %v520, %v520
    %v814 = vpack.c.bf16 %v524, %v524
    %v815 = vpack.c.bf16 %v528, %v528
    %v816 = vpack.c.bf16 %v532, %v532
    %v817 = vpack.c.bf16 %v536, %v536
    %v818 = vpack.c.bf16 %v540, %v540
    %v819 = vpack.c.bf16 %v544, %v544
    %v820 = vpack.c.bf16 %v548, %v548
    %v821 = vpack.c.bf16 %v552, %v552
    %v822 = vpack.c.bf16 %v556, %v556
    %v823 = vpack.c.bf16 %v560, %v560
    %v824 = vpack.c.bf16 %v564, %v564
    %v825 = vpack.c.bf16 %v568, %v568
    %v826 = vpack.c.bf16 %v572, %v572
    %v827 = vpack.c.bf16 %v576, %v576
    %v828 = vpack.c.bf16 %v580, %v580
    %v829 = vpack.c.bf16 %v584, %v584
    %v830 = vpack.c.bf16 %v588, %v588
    %v831 = vpack.c.bf16 %v592, %v592
    %v832 = vpack.c.bf16 %v596, %v596
    %v833 = vpack.c.bf16 %v600, %v600
    %v834 = vpack.c.bf16 %v604, %v604
    %v835 = vpack.c.bf16 %v608, %v608
    %v836 = vpack.c.bf16 %v612, %v612
    %v837 = vpack.c.bf16 %v616, %v616
    %v838 = vpack.c.bf16 %v620, %v620
    %v839 = vpack.c.bf16 %v624, %v624
    %v840 = vpack.c.bf16 %v628, %v628
    %v841 = vpack.c.bf16 %v632, %v632
    %v842 = vpack.c.bf16 %v636, %v636
    %v843 = vpack.c.bf16 %v640, %v640
    %v844 = vpack.c.bf16 %v644, %v644
    %v845 = vpack.c.bf16 %v648, %v648
    %v846 = vpack.c.bf16 %v652, %v652
    %v847 = vpack.c.bf16 %v656, %v656
    %v848 = vpack.c.bf16 %v660, %v660
    %v849 = vpack.c.bf16 %v664, %v664
    %v850 = vpack.c.bf16 %v668, %v668
    %v851 = vpack.c.bf16 %v672, %v672
    %v852 = vpack.c.bf16 %v676, %v676
    %v853 = vpack.c.bf16 %v680, %v680
    %v854 = vpack.c.bf16 %v684, %v684
    %v855 = vpack.c.bf16 %v688, %v688
    %v856 = vpack.c.bf16 %v692, %v692
    %v857 = vpack.c.bf16 %v696, %v696
    %v858 = vpack.c.bf16 %v700, %v700
    %v859 = vpack.c.bf16 %v704, %v704
    %v860 = vpack.c.bf16 %v708, %v708
    %v861 = vpack.c.bf16 %v712, %v712
    %v862 = vpack.c.bf16 %v716, %v716
    %v863 = vpack.c.bf16 %v720, %v720
    %v864 = vpack.c.bf16 %v724, %v724
    %v865 = vpack.c.bf16 %v728, %v728
    %v866 = vpack.c.bf16 %v732, %v732
    %v867 = vpack.c.bf16 %v736, %v736
    %v868 = vpack.c.bf16 %v740, %v740
    %869 = vmatprep.subr.bf16.mxu0 %v406
    %870 = vmatpush1.bf16.xpose.msra.mxu0 %v405
    %871 = vmatprep.subr.bf16.mxu0 0
    %872 = vmatpush1.bf16.xpose.msra.mxu0 0
    %873 = vmatprep.subr.bf16.mxu0 0
    %874 = vmatpush1.bf16.xpose.msra.mxu0 0
    %875 = vmatprep.subr.bf16.mxu0 0
    %876 = vmatpush1.bf16.xpose.msra.mxu0 0
    %877 = vmatprep.subr.bf16.mxu0 0
    %878 = vmatpush1.bf16.xpose.msra.mxu0 0
    %879 = vmatprep.subr.bf16.mxu0 0
    %880 = vmatpush1.bf16.xpose.msra.mxu0 0
    %881 = vmatprep.subr.bf16.mxu0 0
    %882 = vmatpush1.bf16.xpose.msra.mxu0 0
    %883 = vmatprep.subr.bf16.mxu0 0
    %884 = vmatpush1.bf16.xpose.msra.mxu0 0
    %885 = vmatprep.subr.bf16.mxu0 0
    %886 = vmatpush1.bf16.xpose.msra.mxu0 0
    %887 = vmatprep.subr.bf16.mxu0 0
    %888 = vmatpush1.bf16.xpose.msra.mxu0 0
    %889 = vmatprep.subr.bf16.mxu0 0
    %890 = vmatpush1.bf16.xpose.msra.mxu0 0
    %891 = vmatprep.subr.bf16.mxu0 0
    %892 = vmatpush1.bf16.xpose.msra.mxu0 0
    %893 = vmatprep.subr.bf16.mxu0 0
    %894 = vmatpush1.bf16.xpose.msra.mxu0 0
    %895 = vmatprep.subr.bf16.mxu0 0
    %896 = vmatpush1.bf16.xpose.msra.mxu0 0
    %897 = vmatprep.subr.bf16.mxu0 0
    %898 = vmatpush1.bf16.xpose.msra.mxu0 0
    %899 = vmatprep.subr.bf16.mxu0 0
    %900 = vmatpush1.bf16.xpose.msra.mxu0 0
    %901 = vmatprep.mubr.bf16.mxu0 %v806
    %902 = vmatmul.mubr.bf16.gmra.mrb[0].mxu0 %v805
    %v903 = vpop.f32.mrb[0].mxu0
    %v904 = vadd.f32 0.0, %v903
    %v905 = vpop.f32.mrb[0].mxu0
    %v906 = vpop.f32.mrb[0].mxu0
    %v907 = vpop.f32.mrb[0].mxu0
    %908 = vdwg.mxu0
    %909 = vmatprep.subr.bf16.mxu0 %v408
    %910 = vmatpush1.bf16.xpose.msra.mxu0 %v407
    %911 = vmatprep.subr.bf16.mxu0 0
    %912 = vmatpush1.bf16.xpose.msra.mxu0 0
    %913 = vmatprep.subr.bf16.mxu0 0
    %914 = vmatpush1.bf16.xpose.msra.mxu0 0
    %915 = vmatprep.subr.bf16.mxu0 0
    %916 = vmatpush1.bf16.xpose.msra.mxu0 0
    %917 = vmatprep.subr.bf16.mxu0 0
    %918 = vmatpush1.bf16.xpose.msra.mxu0 0
    %919 = vmatprep.subr.bf16.mxu0 0
    %920 = vmatpush1.bf16.xpose.msra.mxu0 0
    %921 = vmatprep.subr.bf16.mxu0 0
    %922 = vmatpush1.bf16.xpose.msra.mxu0 0
    %923 = vmatprep.subr.bf16.mxu0 0
    %924 = vmatpush1.bf16.xpose.msra.mxu0 0
    %925 = vmatprep.subr.bf16.mxu0 0
    %926 = vmatpush1.bf16.xpose.msra.mxu0 0
    %927 = vmatprep.subr.bf16.mxu0 0
    %928 = vmatpush1.bf16.xpose.msra.mxu0 0
    %929 = vmatprep.subr.bf16.mxu0 0
    %930 = vmatpush1.bf16.xpose.msra.mxu0 0
    %931 = vmatprep.subr.bf16.mxu0 0
    %932 = vmatpush1.bf16.xpose.msra.mxu0 0
    %933 = vmatprep.subr.bf16.mxu0 0
    %934 = vmatpush1.bf16.xpose.msra.mxu0 0
    %935 = vmatprep.subr.bf16.mxu0 0
    %936 = vmatpush1.bf16.xpose.msra.mxu0 0
    %937 = vmatprep.subr.bf16.mxu0 0
    %938 = vmatpush1.bf16.xpose.msra.mxu0 0
    %939 = vmatprep.subr.bf16.mxu0 0
    %940 = vmatpush1.bf16.xpose.msra.mxu0 0
    %941 = vmatprep.mubr.bf16.mxu0 %v808
    %942 = vmatmul.mubr.bf16.gmra.mrb[0].mxu0 %v807
    %v943 = vpop.f32.mrb[0].mxu0
    %v944 = vadd.f32 %v904, %v943
    %v945 = vpop.f32.mrb[0].mxu0
    %v946 = vpop.f32.mrb[0].mxu0
    %v947 = vpop.f32.mrb[0].mxu0
    %948 = vdwg.mxu0
    %949 = vmatprep.subr.bf16.mxu0 %v410
    %950 = vmatpush1.bf16.xpose.msra.mxu0 %v409
    %951 = vmatprep.subr.bf16.mxu0 0
    %952 = vmatpush1.bf16.xpose.msra.mxu0 0
    %953 = vmatprep.subr.bf16.mxu0 0
    %954 = vmatpush1.bf16.xpose.msra.mxu0 0
    %955 = vmatprep.subr.bf16.mxu0 0
    %956 = vmatpush1.bf16.xpose.msra.mxu0 0
    %957 = vmatprep.subr.bf16.mxu0 0
    %958 = vmatpush1.bf16.xpose.msra.mxu0 0
    %959 = vmatprep.subr.bf16.mxu0 0
    %960 = vmatpush1.bf16.xpose.msra.mxu0 0
    %961 = vmatprep.subr.bf16.mxu0 0
    %962 = vmatpush1.bf16.xpose.msra.mxu0 0
    %963 = vmatprep.subr.bf16.mxu0 0
    %964 = vmatpush1.bf16.xpose.msra.mxu0 0
    %965 = vmatprep.subr.bf16.mxu0 0
    %966 = vmatpush1.bf16.xpose.msra.mxu0 0
    %967 = vmatprep.subr.bf16.mxu0 0
    %968 = vmatpush1.bf16.xpose.msra.mxu0 0
    %969 = vmatprep.subr.bf16.mxu0 0
    %970 = vmatpush1.bf16.xpose.msra.mxu0 0
    %971 = vmatprep.subr.bf16.mxu0 0
    %972 = vmatpush1.bf16.xpose.msra.mxu0 0
    %973 = vmatprep.subr.bf16.mxu0 0
    %974 = vmatpush1.bf16.xpose.msra.mxu0 0
    %975 = vmatprep.subr.bf16.mxu0 0
    %976 = vmatpush1.bf16.xpose.msra.mxu0 0
    %977 = vmatprep.subr.bf16.mxu0 0
    %978 = vmatpush1.bf16.xpose.msra.mxu0 0
    %979 = vmatprep.subr.bf16.mxu0 0
    %980 = vmatpush1.bf16.xpose.msra.mxu0 0
    %981 = vmatprep.mubr.bf16.mxu0 %v810
    %982 = vmatmul.mubr.bf16.gmra.mrb[0].mxu0 %v809
    %v983 = vpop.f32.mrb[0].mxu0
    %v984 = vadd.f32 %v944, %v983
    %v985 = vpop.f32.mrb[0].mxu0
    %v986 = vpop.f32.mrb[0].mxu0
    %v987 = vpop.f32.mrb[0].mxu0
    %988 = vdwg.mxu0
    %989 = vmatprep.subr.bf16.mxu0 %v412
    %990 = vmatpush1.bf16.xpose.msra.mxu0 %v411
    %991 = vmatprep.subr.bf16.mxu0 0
    %992 = vmatpush1.bf16.xpose.msra.mxu0 0
    %993 = vmatprep.subr.bf16.mxu0 0
    %994 = vmatpush1.bf16.xpose.msra.mxu0 0
    %995 = vmatprep.subr.bf16.mxu0 0
    %996 = vmatpush1.bf16.xpose.msra.mxu0 0
    %997 = vmatprep.subr.bf16.mxu0 0
    %998 = vmatpush1.bf16.xpose.msra.mxu0 0
    %999 = vmatprep.subr.bf16.mxu0 0
    %1000 = vmatpush1.bf16.xpose.msra.mxu0 0
    %1001 = vmatprep.subr.bf16.mxu0 0
    %1002 = vmatpush1.bf16.xpose.msra.mxu0 0
    %1003 = vmatprep.subr.bf16.mxu0 0
    %1004 = vmatpush1.bf16.xpose.msra.mxu0 0
    %1005 = vmatprep.subr.bf16.mxu0 0
    %1006 = vmatpush1.bf16.xpose.msra.mxu0 0
    %1007 = vmatprep.subr.bf16.mxu0 0
    %1008 = vmatpush1.bf16.xpose.msra.mxu0 0
    %1009 = vmatprep.subr.bf16.mxu0 0
    %1010 = vmatpush1.bf16.xpose.msra.mxu0 0
    %1011 = vmatprep.subr.bf16.mxu0 0
    %1012 = vmatpush1.bf16.xpose.msra.mxu0 0
    %1013 = vmatprep.subr.bf16.mxu0 0
    %1014 = vmatpush1.bf16.xpose.msra.mxu0 0
    %1015 = vmatprep.subr.bf16.mxu0 0
    %1016 = vmatpush1.bf16.xpose.msra.mxu0 0
    %1017 = vmatprep.subr.bf16.mxu0 0
    %1018 = vmatpush1.bf16.xpose.msra.mxu0 0
    %1019 = vmatprep.subr.bf16.mxu0 0
    %1020 = vmatpush1.bf16.xpose.msra.mxu0 0
    %1021 = vmatprep.mubr.bf16.mxu0 %v812
    %1022 = vmatmul.mubr.bf16.gmra.mrb[0].mxu0 %v811
    %v1023 = vpop.f32.mrb[0].mxu0
    %v1024 = vadd.f32 %v984, %v1023
    %v1025 = vpop.f32.mrb[0].mxu0
    %v1026 = vpop.f32.mrb[0].mxu0
    %v1027 = vpop.f32.mrb[0].mxu0
    %1028 = vdwg.mxu0
    %1029 = vmatprep.subr.bf16.mxu0 %v414
    %1030 = vmatpush1.bf16.xpose.msra.mxu0 %v413
    %1031 = vmatprep.subr.bf16.mxu0 0
    %1032 = vmatpush1.bf16.xpose.msra.mxu0 0
    %1033 = vmatprep.subr.bf16.mxu0 0
    %1034 = vmatpush1.bf16.xpose.msra.mxu0 0
    %1035 = vmatprep.subr.bf16.mxu0 0
    %1036 = vmatpush1.bf16.xpose.msra.mxu0 0
    %1037 = vmatprep.subr.bf16.mxu0 0
    %1038 = vmatpush1.bf16.xpose.msra.mxu0 0
    %1039 = vmatprep.subr.bf16.mxu0 0
    %1040 = vmatpush1.bf16.xpose.msra.mxu0 0
    %1041 = vmatprep.subr.bf16.mxu0 0
    %1042 = vmatpush1.bf16.xpose.msra.mxu0 0
    %1043 = vmatprep.subr.bf16.mxu0 0
    %1044 = vmatpush1.bf16.xpose.msra.mxu0 0
    %1045 = vmatprep.subr.bf16.mxu0 0
    %1046 = vmatpush1.bf16.xpose.msra.mxu0 0
    %1047 = vmatprep.subr.bf16.mxu0 0
    %1048 = vmatpush1.bf16.xpose.msra.mxu0 0
    %1049 = vmatprep.subr.bf16.mxu0 0
    %1050 = vmatpush1.bf16.xpose.msra.mxu0 0
    %1051 = vmatprep.subr.bf16.mxu0 0
    %1052 = vmatpush1.bf16.xpose.msra.mxu0 0
    %1053 = vmatprep.subr.bf16.mxu0 0
    %1054 = vmatpush1.bf16.xpose.msra.mxu0 0
    %1055 = vmatprep.subr.bf16.mxu0 0
    %1056 = vmatpush1.bf16.xpose.msra.mxu0 0
    %1057 = vmatprep.subr.bf16.mxu0 0
    %1058 = vmatpush1.bf16.xpose.msra.mxu0 0
    %1059 = vmatprep.subr.bf16.mxu0 0
    %1060 = vmatpush1.bf16.xpose.msra.mxu0 0
    %1061 = vmatprep.mubr.bf16.mxu0 %v814
    %1062 = vmatmul.mubr.bf16.gmra.mrb[0].mxu0 %v813
    %v1063 = vpop.f32.mrb[0].mxu0
    %v1064 = vadd.f32 %v1024, %v1063
    %v1065 = vpop.f32.mrb[0].mxu0
    %v1066 = vpop.f32.mrb[0].mxu0
    %v1067 = vpop.f32.mrb[0].mxu0
    %1068 = vdwg.mxu0
    %1069 = vmatprep.subr.bf16.mxu0 %v416
    %1070 = vmatpush1.bf16.xpose.msra.mxu0 %v415
    %1071 = vmatprep.subr.bf16.mxu0 0
    %1072 = vmatpush1.bf16.xpose.msra.mxu0 0
    %1073 = vmatprep.subr.bf16.mxu0 0
    %1074 = vmatpush1.bf16.xpose.msra.mxu0 0
    %1075 = vmatprep.subr.bf16.mxu0 0
    %1076 = vmatpush1.bf16.xpose.msra.mxu0 0
    %1077 = vmatprep.subr.bf16.mxu0 0
    %1078 = vmatpush1.bf16.xpose.msra.mxu0 0
    %1079 = vmatprep.subr.bf16.mxu0 0
    %1080 = vmatpush1.bf16.xpose.msra.mxu0 0
    %1081 = vmatprep.subr.bf16.mxu0 0
    %1082 = vmatpush1.bf16.xpose.msra.mxu0 0
    %1083 = vmatprep.subr.bf16.mxu0 0
    %1084 = vmatpush1.bf16.xpose.msra.mxu0 0
    %1085 = vmatprep.subr.bf16.mxu0 0
    %1086 = vmatpush1.bf16.xpose.msra.mxu0 0
    %1087 = vmatprep.subr.bf16.mxu0 0
    %1088 = vmatpush1.bf16.xpose.msra.mxu0 0
    %1089 = vmatprep.subr.bf16.mxu0 0
    %1090 = vmatpush1.bf16.xpose.msra.mxu0 0
    %1091 = vmatprep.subr.bf16.mxu0 0
    %1092 = vmatpush1.bf16.xpose.msra.mxu0 0
    %1093 = vmatprep.subr.bf16.mxu0 0
    %1094 = vmatpush1.bf16.xpose.msra.mxu0 0
    %1095 = vmatprep.subr.bf16.mxu0 0
    %1096 = vmatpush1.bf16.xpose.msra.mxu0 0
    %1097 = vmatprep.subr.bf16.mxu0 0
    %1098 = vmatpush1.bf16.xpose.msra.mxu0 0
    %1099 = vmatprep.subr.bf16.mxu0 0
    %1100 = vmatpush1.bf16.xpose.msra.mxu0 0
    %1101 = vmatprep.mubr.bf16.mxu0 %v816
    %1102 = vmatmul.mubr.bf16.gmra.mrb[0].mxu0 %v815
    %v1103 = vpop.f32.mrb[0].mxu0
    %v1104 = vadd.f32 %v1064, %v1103
    %v1105 = vpop.f32.mrb[0].mxu0
    %v1106 = vpop.f32.mrb[0].mxu0
    %v1107 = vpop.f32.mrb[0].mxu0
    %1108 = vdwg.mxu0
    %1109 = vmatprep.subr.bf16.mxu0 %v418
    %1110 = vmatpush1.bf16.xpose.msra.mxu0 %v417
    %1111 = vmatprep.subr.bf16.mxu0 0
    %1112 = vmatpush1.bf16.xpose.msra.mxu0 0
    %1113 = vmatprep.subr.bf16.mxu0 0
    %1114 = vmatpush1.bf16.xpose.msra.mxu0 0
    %1115 = vmatprep.subr.bf16.mxu0 0
    %1116 = vmatpush1.bf16.xpose.msra.mxu0 0
    %1117 = vmatprep.subr.bf16.mxu0 0
    %1118 = vmatpush1.bf16.xpose.msra.mxu0 0
    %1119 = vmatprep.subr.bf16.mxu0 0
    %1120 = vmatpush1.bf16.xpose.msra.mxu0 0
    %1121 = vmatprep.subr.bf16.mxu0 0
    %1122 = vmatpush1.bf16.xpose.msra.mxu0 0
    %1123 = vmatprep.subr.bf16.mxu0 0
    %1124 = vmatpush1.bf16.xpose.msra.mxu0 0
    %1125 = vmatprep.subr.bf16.mxu0 0
    %1126 = vmatpush1.bf16.xpose.msra.mxu0 0
    %1127 = vmatprep.subr.bf16.mxu0 0
    %1128 = vmatpush1.bf16.xpose.msra.mxu0 0
    %1129 = vmatprep.subr.bf16.mxu0 0
    %1130 = vmatpush1.bf16.xpose.msra.mxu0 0
    %1131 = vmatprep.subr.bf16.mxu0 0
    %1132 = vmatpush1.bf16.xpose.msra.mxu0 0
    %1133 = vmatprep.subr.bf16.mxu0 0
    %1134 = vmatpush1.bf16.xpose.msra.mxu0 0
    %1135 = vmatprep.subr.bf16.mxu0 0
    %1136 = vmatpush1.bf16.xpose.msra.mxu0 0
    %1137 = vmatprep.subr.bf16.mxu0 0
    %1138 = vmatpush1.bf16.xpose.msra.mxu0 0
    %1139 = vmatprep.subr.bf16.mxu0 0
    %1140 = vmatpush1.bf16.xpose.msra.mxu0 0
    %1141 = vmatprep.mubr.bf16.mxu0 %v818
    %1142 = vmatmul.mubr.bf16.gmra.mrb[0].mxu0 %v817
    %v1143 = vpop.f32.mrb[0].mxu0
    %v1144 = vadd.f32 %v1104, %v1143
    %v1145 = vpop.f32.mrb[0].mxu0
    %v1146 = vpop.f32.mrb[0].mxu0
    %v1147 = vpop.f32.mrb[0].mxu0
    %1148 = vdwg.mxu0
    %1149 = vmatprep.subr.bf16.mxu0 %v420
    %1150 = vmatpush1.bf16.xpose.msra.mxu0 %v419
    %1151 = vmatprep.subr.bf16.mxu0 0
    %1152 = vmatpush1.bf16.xpose.msra.mxu0 0
    %1153 = vmatprep.subr.bf16.mxu0 0
    %1154 = vmatpush1.bf16.xpose.msra.mxu0 0
    %1155 = vmatprep.subr.bf16.mxu0 0
    %1156 = vmatpush1.bf16.xpose.msra.mxu0 0
    %1157 = vmatprep.subr.bf16.mxu0 0
    %1158 = vmatpush1.bf16.xpose.msra.mxu0 0
    %1159 = vmatprep.subr.bf16.mxu0 0
    %1160 = vmatpush1.bf16.xpose.msra.mxu0 0
    %1161 = vmatprep.subr.bf16.mxu0 0
    %1162 = vmatpush1.bf16.xpose.msra.mxu0 0
    %1163 = vmatprep.subr.bf16.mxu0 0
    %1164 = vmatpush1.bf16.xpose.msra.mxu0 0
    %1165 = vmatprep.subr.bf16.mxu0 0
    %1166 = vmatpush1.bf16.xpose.msra.mxu0 0
    %1167 = vmatprep.subr.bf16.mxu0 0
    %1168 = vmatpush1.bf16.xpose.msra.mxu0 0
    %1169 = vmatprep.subr.bf16.mxu0 0
    %1170 = vmatpush1.bf16.xpose.msra.mxu0 0
    %1171 = vmatprep.subr.bf16.mxu0 0
    %1172 = vmatpush1.bf16.xpose.msra.mxu0 0
    %1173 = vmatprep.subr.bf16.mxu0 0
    %1174 = vmatpush1.bf16.xpose.msra.mxu0 0
    %1175 = vmatprep.subr.bf16.mxu0 0
    %1176 = vmatpush1.bf16.xpose.msra.mxu0 0
    %1177 = vmatprep.subr.bf16.mxu0 0
    %1178 = vmatpush1.bf16.xpose.msra.mxu0 0
    %1179 = vmatprep.subr.bf16.mxu0 0
    %1180 = vmatpush1.bf16.xpose.msra.mxu0 0
    %1181 = vmatprep.mubr.bf16.mxu0 %v820
    %1182 = vmatmul.mubr.bf16.gmra.mrb[0].mxu0 %v819
    %v1183 = vpop.f32.mrb[0].mxu0
    %v1184 = vadd.f32 %v1144, %v1183
    %v1185 = vpop.f32.mrb[0].mxu0
    %v1186 = vpop.f32.mrb[0].mxu0
    %v1187 = vpop.f32.mrb[0].mxu0
    %1188 = vdwg.mxu0
    %1189 = vmatprep.subr.bf16.mxu0 %v422
    %1190 = vmatpush1.bf16.xpose.msra.mxu0 %v421
    %1191 = vmatprep.subr.bf16.mxu0 0
    %1192 = vmatpush1.bf16.xpose.msra.mxu0 0
    %1193 = vmatprep.subr.bf16.mxu0 0
    %1194 = vmatpush1.bf16.xpose.msra.mxu0 0
    %1195 = vmatprep.subr.bf16.mxu0 0
    %1196 = vmatpush1.bf16.xpose.msra.mxu0 0
    %1197 = vmatprep.subr.bf16.mxu0 0
    %1198 = vmatpush1.bf16.xpose.msra.mxu0 0
    %1199 = vmatprep.subr.bf16.mxu0 0
    %1200 = vmatpush1.bf16.xpose.msra.mxu0 0
    %1201 = vmatprep.subr.bf16.mxu0 0
    %1202 = vmatpush1.bf16.xpose.msra.mxu0 0
    %1203 = vmatprep.subr.bf16.mxu0 0
    %1204 = vmatpush1.bf16.xpose.msra.mxu0 0
    %1205 = vmatprep.subr.bf16.mxu0 0
    %1206 = vmatpush1.bf16.xpose.msra.mxu0 0
    %1207 = vmatprep.subr.bf16.mxu0 0
    %1208 = vmatpush1.bf16.xpose.msra.mxu0 0
    %1209 = vmatprep.subr.bf16.mxu0 0
    %1210 = vmatpush1.bf16.xpose.msra.mxu0 0
    %1211 = vmatprep.subr.bf16.mxu0 0
    %1212 = vmatpush1.bf16.xpose.msra.mxu0 0
    %1213 = vmatprep.subr.bf16.mxu0 0
    %1214 = vmatpush1.bf16.xpose.msra.mxu0 0
    %1215 = vmatprep.subr.bf16.mxu0 0
    %1216 = vmatpush1.bf16.xpose.msra.mxu0 0
    %1217 = vmatprep.subr.bf16.mxu0 0
    %1218 = vmatpush1.bf16.xpose.msra.mxu0 0
    %1219 = vmatprep.subr.bf16.mxu0 0
    %1220 = vmatpush1.bf16.xpose.msra.mxu0 0
    %1221 = vmatprep.mubr.bf16.mxu0 %v822
    %1222 = vmatmul.mubr.bf16.gmra.mrb[0].mxu0 %v821
    %v1223 = vpop.f32.mrb[0].mxu0
    %v1224 = vadd.f32 %v1184, %v1223
    %v1225 = vpop.f32.mrb[0].mxu0
    %v1226 = vpop.f32.mrb[0].mxu0
    %v1227 = vpop.f32.mrb[0].mxu0
    %1228 = vdwg.mxu0
    %1229 = vmatprep.subr.bf16.mxu0 %v424
    %1230 = vmatpush1.bf16.xpose.msra.mxu0 %v423
    %1231 = vmatprep.subr.bf16.mxu0 0
    %1232 = vmatpush1.bf16.xpose.msra.mxu0 0
    %1233 = vmatprep.subr.bf16.mxu0 0
    %1234 = vmatpush1.bf16.xpose.msra.mxu0 0
    %1235 = vmatprep.subr.bf16.mxu0 0
    %1236 = vmatpush1.bf16.xpose.msra.mxu0 0
    %1237 = vmatprep.subr.bf16.mxu0 0
    %1238 = vmatpush1.bf16.xpose.msra.mxu0 0
    %1239 = vmatprep.subr.bf16.mxu0 0
    %1240 = vmatpush1.bf16.xpose.msra.mxu0 0
    %1241 = vmatprep.subr.bf16.mxu0 0
    %1242 = vmatpush1.bf16.xpose.msra.mxu0 0
    %1243 = vmatprep.subr.bf16.mxu0 0
    %1244 = vmatpush1.bf16.xpose.msra.mxu0 0
    %1245 = vmatprep.subr.bf16.mxu0 0
    %1246 = vmatpush1.bf16.xpose.msra.mxu0 0
    %1247 = vmatprep.subr.bf16.mxu0 0
    %1248 = vmatpush1.bf16.xpose.msra.mxu0 0
    %1249 = vmatprep.subr.bf16.mxu0 0
    %1250 = vmatpush1.bf16.xpose.msra.mxu0 0
    %1251 = vmatprep.subr.bf16.mxu0 0
    %1252 = vmatpush1.bf16.xpose.msra.mxu0 0
    %1253 = vmatprep.subr.bf16.mxu0 0
    %1254 = vmatpush1.bf16.xpose.msra.mxu0 0
    %1255 = vmatprep.subr.bf16.mxu0 0
    %1256 = vmatpush1.bf16.xpose.msra.mxu0 0
    %1257 = vmatprep.subr.bf16.mxu0 0
    %1258 = vmatpush1.bf16.xpose.msra.mxu0 0
    %1259 = vmatprep.subr.bf16.mxu0 0
    %1260 = vmatpush1.bf16.xpose.msra.mxu0 0
    %1261 = vmatprep.mubr.bf16.mxu0 %v824
    %1262 = vmatmul.mubr.bf16.gmra.mrb[0].mxu0 %v823
    %v1263 = vpop.f32.mrb[0].mxu0
    %v1264 = vadd.f32 %v1224, %v1263
    %v1265 = vpop.f32.mrb[0].mxu0
    %v1266 = vpop.f32.mrb[0].mxu0
    %v1267 = vpop.f32.mrb[0].mxu0
    %1268 = vdwg.mxu0
    %1269 = vmatprep.subr.bf16.mxu0 %v426
    %1270 = vmatpush1.bf16.xpose.msra.mxu0 %v425
    %1271 = vmatprep.subr.bf16.mxu0 0
    %1272 = vmatpush1.bf16.xpose.msra.mxu0 0
    %1273 = vmatprep.subr.bf16.mxu0 0
    %1274 = vmatpush1.bf16.xpose.msra.mxu0 0
    %1275 = vmatprep.subr.bf16.mxu0 0
    %1276 = vmatpush1.bf16.xpose.msra.mxu0 0
    %1277 = vmatprep.subr.bf16.mxu0 0
    %1278 = vmatpush1.bf16.xpose.msra.mxu0 0
    %1279 = vmatprep.subr.bf16.mxu0 0
    %1280 = vmatpush1.bf16.xpose.msra.mxu0 0
    %1281 = vmatprep.subr.bf16.mxu0 0
    %1282 = vmatpush1.bf16.xpose.msra.mxu0 0
    %1283 = vmatprep.subr.bf16.mxu0 0
    %1284 = vmatpush1.bf16.xpose.msra.mxu0 0
    %1285 = vmatprep.subr.bf16.mxu0 0
    %1286 = vmatpush1.bf16.xpose.msra.mxu0 0
    %1287 = vmatprep.subr.bf16.mxu0 0
    %1288 = vmatpush1.bf16.xpose.msra.mxu0 0
    %1289 = vmatprep.subr.bf16.mxu0 0
    %1290 = vmatpush1.bf16.xpose.msra.mxu0 0
    %1291 = vmatprep.subr.bf16.mxu0 0
    %1292 = vmatpush1.bf16.xpose.msra.mxu0 0
    %1293 = vmatprep.subr.bf16.mxu0 0
    %1294 = vmatpush1.bf16.xpose.msra.mxu0 0
    %1295 = vmatprep.subr.bf16.mxu0 0
    %1296 = vmatpush1.bf16.xpose.msra.mxu0 0
    %1297 = vmatprep.subr.bf16.mxu0 0
    %1298 = vmatpush1.bf16.xpose.msra.mxu0 0
    %1299 = vmatprep.subr.bf16.mxu0 0
    %1300 = vmatpush1.bf16.xpose.msra.mxu0 0
    %1301 = vmatprep.mubr.bf16.mxu0 %v826
    %1302 = vmatmul.mubr.bf16.gmra.mrb[0].mxu0 %v825
    %v1303 = vpop.f32.mrb[0].mxu0
    %v1304 = vadd.f32 %v1264, %v1303
    %v1305 = vpop.f32.mrb[0].mxu0
    %v1306 = vpop.f32.mrb[0].mxu0
    %v1307 = vpop.f32.mrb[0].mxu0
    %1308 = vdwg.mxu0
    %1309 = vmatprep.subr.bf16.mxu0 %v428
    %1310 = vmatpush1.bf16.xpose.msra.mxu0 %v427
    %1311 = vmatprep.subr.bf16.mxu0 0
    %1312 = vmatpush1.bf16.xpose.msra.mxu0 0
    %1313 = vmatprep.subr.bf16.mxu0 0
    %1314 = vmatpush1.bf16.xpose.msra.mxu0 0
    %1315 = vmatprep.subr.bf16.mxu0 0
    %1316 = vmatpush1.bf16.xpose.msra.mxu0 0
    %1317 = vmatprep.subr.bf16.mxu0 0
    %1318 = vmatpush1.bf16.xpose.msra.mxu0 0
    %1319 = vmatprep.subr.bf16.mxu0 0
    %1320 = vmatpush1.bf16.xpose.msra.mxu0 0
    %1321 = vmatprep.subr.bf16.mxu0 0
    %1322 = vmatpush1.bf16.xpose.msra.mxu0 0
    %1323 = vmatprep.subr.bf16.mxu0 0
    %1324 = vmatpush1.bf16.xpose.msra.mxu0 0
    %1325 = vmatprep.subr.bf16.mxu0 0
    %1326 = vmatpush1.bf16.xpose.msra.mxu0 0
    %1327 = vmatprep.subr.bf16.mxu0 0
    %1328 = vmatpush1.bf16.xpose.msra.mxu0 0
    %1329 = vmatprep.subr.bf16.mxu0 0
    %1330 = vmatpush1.bf16.xpose.msra.mxu0 0
    %1331 = vmatprep.subr.bf16.mxu0 0
    %1332 = vmatpush1.bf16.xpose.msra.mxu0 0
    %1333 = vmatprep.subr.bf16.mxu0 0
    %1334 = vmatpush1.bf16.xpose.msra.mxu0 0
    %1335 = vmatprep.subr.bf16.mxu0 0
    %1336 = vmatpush1.bf16.xpose.msra.mxu0 0
    %1337 = vmatprep.subr.bf16.mxu0 0
    %1338 = vmatpush1.bf16.xpose.msra.mxu0 0
    %1339 = vmatprep.subr.bf16.mxu0 0
    %1340 = vmatpush1.bf16.xpose.msra.mxu0 0
    %1341 = vmatprep.mubr.bf16.mxu0 %v828
    %1342 = vmatmul.mubr.bf16.gmra.mrb[0].mxu0 %v827
    %v1343 = vpop.f32.mrb[0].mxu0
    %v1344 = vadd.f32 %v1304, %v1343
    %v1345 = vpop.f32.mrb[0].mxu0
    %v1346 = vpop.f32.mrb[0].mxu0
    %v1347 = vpop.f32.mrb[0].mxu0
    %1348 = vdwg.mxu0
    %1349 = vmatprep.subr.bf16.mxu0 %v430
    %1350 = vmatpush1.bf16.xpose.msra.mxu0 %v429
    %1351 = vmatprep.subr.bf16.mxu0 0
    %1352 = vmatpush1.bf16.xpose.msra.mxu0 0
    %1353 = vmatprep.subr.bf16.mxu0 0
    %1354 = vmatpush1.bf16.xpose.msra.mxu0 0
    %1355 = vmatprep.subr.bf16.mxu0 0
    %1356 = vmatpush1.bf16.xpose.msra.mxu0 0
    %1357 = vmatprep.subr.bf16.mxu0 0
    %1358 = vmatpush1.bf16.xpose.msra.mxu0 0
    %1359 = vmatprep.subr.bf16.mxu0 0
    %1360 = vmatpush1.bf16.xpose.msra.mxu0 0
    %1361 = vmatprep.subr.bf16.mxu0 0
    %1362 = vmatpush1.bf16.xpose.msra.mxu0 0
    %1363 = vmatprep.subr.bf16.mxu0 0
    %1364 = vmatpush1.bf16.xpose.msra.mxu0 0
    %1365 = vmatprep.subr.bf16.mxu0 0
    %1366 = vmatpush1.bf16.xpose.msra.mxu0 0
    %1367 = vmatprep.subr.bf16.mxu0 0
    %1368 = vmatpush1.bf16.xpose.msra.mxu0 0
    %1369 = vmatprep.subr.bf16.mxu0 0
    %1370 = vmatpush1.bf16.xpose.msra.mxu0 0
    %1371 = vmatprep.subr.bf16.mxu0 0
    %1372 = vmatpush1.bf16.xpose.msra.mxu0 0
    %1373 = vmatprep.subr.bf16.mxu0 0
    %1374 = vmatpush1.bf16.xpose.msra.mxu0 0
    %1375 = vmatprep.subr.bf16.mxu0 0
    %1376 = vmatpush1.bf16.xpose.msra.mxu0 0
    %1377 = vmatprep.subr.bf16.mxu0 0
    %1378 = vmatpush1.bf16.xpose.msra.mxu0 0
    %1379 = vmatprep.subr.bf16.mxu0 0
    %1380 = vmatpush1.bf16.xpose.msra.mxu0 0
    %1381 = vmatprep.mubr.bf16.mxu0 %v830
    %1382 = vmatmul.mubr.bf16.gmra.mrb[0].mxu0 %v829
    %v1383 = vpop.f32.mrb[0].mxu0
    %v1384 = vadd.f32 %v1344, %v1383
    %v1385 = vpop.f32.mrb[0].mxu0
    %v1386 = vpop.f32.mrb[0].mxu0
    %v1387 = vpop.f32.mrb[0].mxu0
    %1388 = vdwg.mxu0
    %1389 = vmatprep.subr.bf16.mxu0 %v432
    %1390 = vmatpush1.bf16.xpose.msra.mxu0 %v431
    %1391 = vmatprep.subr.bf16.mxu0 0
    %1392 = vmatpush1.bf16.xpose.msra.mxu0 0
    %1393 = vmatprep.subr.bf16.mxu0 0
    %1394 = vmatpush1.bf16.xpose.msra.mxu0 0
    %1395 = vmatprep.subr.bf16.mxu0 0
    %1396 = vmatpush1.bf16.xpose.msra.mxu0 0
    %1397 = vmatprep.subr.bf16.mxu0 0
    %1398 = vmatpush1.bf16.xpose.msra.mxu0 0
    %1399 = vmatprep.subr.bf16.mxu0 0
    %1400 = vmatpush1.bf16.xpose.msra.mxu0 0
    %1401 = vmatprep.subr.bf16.mxu0 0
    %1402 = vmatpush1.bf16.xpose.msra.mxu0 0
    %1403 = vmatprep.subr.bf16.mxu0 0
    %1404 = vmatpush1.bf16.xpose.msra.mxu0 0
    %1405 = vmatprep.subr.bf16.mxu0 0
    %1406 = vmatpush1.bf16.xpose.msra.mxu0 0
    %1407 = vmatprep.subr.bf16.mxu0 0
    %1408 = vmatpush1.bf16.xpose.msra.mxu0 0
    %1409 = vmatprep.subr.bf16.mxu0 0
    %1410 = vmatpush1.bf16.xpose.msra.mxu0 0
    %1411 = vmatprep.subr.bf16.mxu0 0
    %1412 = vmatpush1.bf16.xpose.msra.mxu0 0
    %1413 = vmatprep.subr.bf16.mxu0 0
    %1414 = vmatpush1.bf16.xpose.msra.mxu0 0
    %1415 = vmatprep.subr.bf16.mxu0 0
    %1416 = vmatpush1.bf16.xpose.msra.mxu0 0
    %1417 = vmatprep.subr.bf16.mxu0 0
    %1418 = vmatpush1.bf16.xpose.msra.mxu0 0
    %1419 = vmatprep.subr.bf16.mxu0 0
    %1420 = vmatpush1.bf16.xpose.msra.mxu0 0
    %1421 = vmatprep.mubr.bf16.mxu0 %v832
    %1422 = vmatmul.mubr.bf16.gmra.mrb[0].mxu0 %v831
    %v1423 = vpop.f32.mrb[0].mxu0
    %v1424 = vadd.f32 %v1384, %v1423
    %v1425 = vpop.f32.mrb[0].mxu0
    %v1426 = vpop.f32.mrb[0].mxu0
    %v1427 = vpop.f32.mrb[0].mxu0
    %1428 = vdwg.mxu0
    %1429 = vmatprep.subr.bf16.mxu0 %v434
    %1430 = vmatpush1.bf16.xpose.msra.mxu0 %v433
    %1431 = vmatprep.subr.bf16.mxu0 0
    %1432 = vmatpush1.bf16.xpose.msra.mxu0 0
    %1433 = vmatprep.subr.bf16.mxu0 0
    %1434 = vmatpush1.bf16.xpose.msra.mxu0 0
    %1435 = vmatprep.subr.bf16.mxu0 0
    %1436 = vmatpush1.bf16.xpose.msra.mxu0 0
    %1437 = vmatprep.subr.bf16.mxu0 0
    %1438 = vmatpush1.bf16.xpose.msra.mxu0 0
    %1439 = vmatprep.subr.bf16.mxu0 0
    %1440 = vmatpush1.bf16.xpose.msra.mxu0 0
    %1441 = vmatprep.subr.bf16.mxu0 0
    %1442 = vmatpush1.bf16.xpose.msra.mxu0 0
    %1443 = vmatprep.subr.bf16.mxu0 0
    %1444 = vmatpush1.bf16.xpose.msra.mxu0 0
    %1445 = vmatprep.subr.bf16.mxu0 0
    %1446 = vmatpush1.bf16.xpose.msra.mxu0 0
    %1447 = vmatprep.subr.bf16.mxu0 0
    %1448 = vmatpush1.bf16.xpose.msra.mxu0 0
    %1449 = vmatprep.subr.bf16.mxu0 0
    %1450 = vmatpush1.bf16.xpose.msra.mxu0 0
    %1451 = vmatprep.subr.bf16.mxu0 0
    %1452 = vmatpush1.bf16.xpose.msra.mxu0 0
    %1453 = vmatprep.subr.bf16.mxu0 0
    %1454 = vmatpush1.bf16.xpose.msra.mxu0 0
    %1455 = vmatprep.subr.bf16.mxu0 0
    %1456 = vmatpush1.bf16.xpose.msra.mxu0 0
    %1457 = vmatprep.subr.bf16.mxu0 0
    %1458 = vmatpush1.bf16.xpose.msra.mxu0 0
    %1459 = vmatprep.subr.bf16.mxu0 0
    %1460 = vmatpush1.bf16.xpose.msra.mxu0 0
    %1461 = vmatprep.mubr.bf16.mxu0 %v834
    %1462 = vmatmul.mubr.bf16.gmra.mrb[0].mxu0 %v833
    %v1463 = vpop.f32.mrb[0].mxu0
    %v1464 = vadd.f32 %v1424, %v1463
    %v1465 = vpop.f32.mrb[0].mxu0
    %v1466 = vpop.f32.mrb[0].mxu0
    %v1467 = vpop.f32.mrb[0].mxu0
    %1468 = vdwg.mxu0
    %1469 = vmatprep.subr.bf16.mxu0 %v436
    %1470 = vmatpush1.bf16.xpose.msra.mxu0 %v435
    %1471 = vmatprep.subr.bf16.mxu0 0
    %1472 = vmatpush1.bf16.xpose.msra.mxu0 0
    %1473 = vmatprep.subr.bf16.mxu0 0
    %1474 = vmatpush1.bf16.xpose.msra.mxu0 0
    %1475 = vmatprep.subr.bf16.mxu0 0
    %1476 = vmatpush1.bf16.xpose.msra.mxu0 0
    %1477 = vmatprep.subr.bf16.mxu0 0
    %1478 = vmatpush1.bf16.xpose.msra.mxu0 0
    %1479 = vmatprep.subr.bf16.mxu0 0
    %1480 = vmatpush1.bf16.xpose.msra.mxu0 0
    %1481 = vmatprep.subr.bf16.mxu0 0
    %1482 = vmatpush1.bf16.xpose.msra.mxu0 0
    %1483 = vmatprep.subr.bf16.mxu0 0
    %1484 = vmatpush1.bf16.xpose.msra.mxu0 0
    %1485 = vmatprep.subr.bf16.mxu0 0
    %1486 = vmatpush1.bf16.xpose.msra.mxu0 0
    %1487 = vmatprep.subr.bf16.mxu0 0
    %1488 = vmatpush1.bf16.xpose.msra.mxu0 0
    %1489 = vmatprep.subr.bf16.mxu0 0
    %1490 = vmatpush1.bf16.xpose.msra.mxu0 0
    %1491 = vmatprep.subr.bf16.mxu0 0
    %1492 = vmatpush1.bf16.xpose.msra.mxu0 0
    %1493 = vmatprep.subr.bf16.mxu0 0
    %1494 = vmatpush1.bf16.xpose.msra.mxu0 0
    %1495 = vmatprep.subr.bf16.mxu0 0
    %1496 = vmatpush1.bf16.xpose.msra.mxu0 0
    %1497 = vmatprep.subr.bf16.mxu0 0
    %1498 = vmatpush1.bf16.xpose.msra.mxu0 0
    %1499 = vmatprep.subr.bf16.mxu0 0
    %1500 = vmatpush1.bf16.xpose.msra.mxu0 0
    %1501 = vmatprep.mubr.bf16.mxu0 %v836
    %1502 = vmatmul.mubr.bf16.gmra.mrb[0].mxu0 %v835
    %v1503 = vpop.f32.mrb[0].mxu0
    %v1504 = vadd.f32 %v1464, %v1503
    %v1505 = vpop.f32.mrb[0].mxu0
    %v1506 = vpop.f32.mrb[0].mxu0
    %v1507 = vpop.f32.mrb[0].mxu0
    %1508 = vdwg.mxu0
    %1509 = vmatprep.subr.bf16.mxu0 %v438
    %1510 = vmatpush1.bf16.xpose.msra.mxu0 %v437
    %1511 = vmatprep.subr.bf16.mxu0 0
    %1512 = vmatpush1.bf16.xpose.msra.mxu0 0
    %1513 = vmatprep.subr.bf16.mxu0 0
    %1514 = vmatpush1.bf16.xpose.msra.mxu0 0
    %1515 = vmatprep.subr.bf16.mxu0 0
    %1516 = vmatpush1.bf16.xpose.msra.mxu0 0
    %1517 = vmatprep.subr.bf16.mxu0 0
    %1518 = vmatpush1.bf16.xpose.msra.mxu0 0
    %1519 = vmatprep.subr.bf16.mxu0 0
    %1520 = vmatpush1.bf16.xpose.msra.mxu0 0
    %1521 = vmatprep.subr.bf16.mxu0 0
    %1522 = vmatpush1.bf16.xpose.msra.mxu0 0
    %1523 = vmatprep.subr.bf16.mxu0 0
    %1524 = vmatpush1.bf16.xpose.msra.mxu0 0
    %1525 = vmatprep.subr.bf16.mxu0 0
    %1526 = vmatpush1.bf16.xpose.msra.mxu0 0
    %1527 = vmatprep.subr.bf16.mxu0 0
    %1528 = vmatpush1.bf16.xpose.msra.mxu0 0
    %1529 = vmatprep.subr.bf16.mxu0 0
    %1530 = vmatpush1.bf16.xpose.msra.mxu0 0
    %1531 = vmatprep.subr.bf16.mxu0 0
    %1532 = vmatpush1.bf16.xpose.msra.mxu0 0
    %1533 = vmatprep.subr.bf16.mxu0 0
    %1534 = vmatpush1.bf16.xpose.msra.mxu0 0
    %1535 = vmatprep.subr.bf16.mxu0 0
    %1536 = vmatpush1.bf16.xpose.msra.mxu0 0
    %1537 = vmatprep.subr.bf16.mxu0 0
    %1538 = vmatpush1.bf16.xpose.msra.mxu0 0
    %1539 = vmatprep.subr.bf16.mxu0 0
    %1540 = vmatpush1.bf16.xpose.msra.mxu0 0
    %1541 = vmatprep.mubr.bf16.mxu0 %v838
    %1542 = vmatmul.mubr.bf16.gmra.mrb[0].mxu0 %v837
    %v1543 = vpop.f32.mrb[0].mxu0
    %v1544 = vadd.f32 %v1504, %v1543
    %v1545 = vpop.f32.mrb[0].mxu0
    %v1546 = vpop.f32.mrb[0].mxu0
    %v1547 = vpop.f32.mrb[0].mxu0
    %1548 = vdwg.mxu0
    %1549 = vmatprep.subr.bf16.mxu0 %v440
    %1550 = vmatpush1.bf16.xpose.msra.mxu0 %v439
    %1551 = vmatprep.subr.bf16.mxu0 0
    %1552 = vmatpush1.bf16.xpose.msra.mxu0 0
    %1553 = vmatprep.subr.bf16.mxu0 0
    %1554 = vmatpush1.bf16.xpose.msra.mxu0 0
    %1555 = vmatprep.subr.bf16.mxu0 0
    %1556 = vmatpush1.bf16.xpose.msra.mxu0 0
    %1557 = vmatprep.subr.bf16.mxu0 0
    %1558 = vmatpush1.bf16.xpose.msra.mxu0 0
    %1559 = vmatprep.subr.bf16.mxu0 0
    %1560 = vmatpush1.bf16.xpose.msra.mxu0 0
    %1561 = vmatprep.subr.bf16.mxu0 0
    %1562 = vmatpush1.bf16.xpose.msra.mxu0 0
    %1563 = vmatprep.subr.bf16.mxu0 0
    %1564 = vmatpush1.bf16.xpose.msra.mxu0 0
    %1565 = vmatprep.subr.bf16.mxu0 0
    %1566 = vmatpush1.bf16.xpose.msra.mxu0 0
    %1567 = vmatprep.subr.bf16.mxu0 0
    %1568 = vmatpush1.bf16.xpose.msra.mxu0 0
    %1569 = vmatprep.subr.bf16.mxu0 0
    %1570 = vmatpush1.bf16.xpose.msra.mxu0 0
    %1571 = vmatprep.subr.bf16.mxu0 0
    %1572 = vmatpush1.bf16.xpose.msra.mxu0 0
    %1573 = vmatprep.subr.bf16.mxu0 0
    %1574 = vmatpush1.bf16.xpose.msra.mxu0 0
    %1575 = vmatprep.subr.bf16.mxu0 0
    %1576 = vmatpush1.bf16.xpose.msra.mxu0 0
    %1577 = vmatprep.subr.bf16.mxu0 0
    %1578 = vmatpush1.bf16.xpose.msra.mxu0 0
    %1579 = vmatprep.subr.bf16.mxu0 0
    %1580 = vmatpush1.bf16.xpose.msra.mxu0 0
    %1581 = vmatprep.mubr.bf16.mxu0 %v840
    %1582 = vmatmul.mubr.bf16.gmra.mrb[0].mxu0 %v839
    %v1583 = vpop.f32.mrb[0].mxu0
    %v1584 = vadd.f32 %v1544, %v1583
    %v1585 = vpop.f32.mrb[0].mxu0
    %v1586 = vpop.f32.mrb[0].mxu0
    %v1587 = vpop.f32.mrb[0].mxu0
    %1588 = vdwg.mxu0
    %1589 = vmatprep.subr.bf16.mxu0 %v442
    %1590 = vmatpush1.bf16.xpose.msra.mxu0 %v441
    %1591 = vmatprep.subr.bf16.mxu0 0
    %1592 = vmatpush1.bf16.xpose.msra.mxu0 0
    %1593 = vmatprep.subr.bf16.mxu0 0
    %1594 = vmatpush1.bf16.xpose.msra.mxu0 0
    %1595 = vmatprep.subr.bf16.mxu0 0
    %1596 = vmatpush1.bf16.xpose.msra.mxu0 0
    %1597 = vmatprep.subr.bf16.mxu0 0
    %1598 = vmatpush1.bf16.xpose.msra.mxu0 0
    %1599 = vmatprep.subr.bf16.mxu0 0
    %1600 = vmatpush1.bf16.xpose.msra.mxu0 0
    %1601 = vmatprep.subr.bf16.mxu0 0
    %1602 = vmatpush1.bf16.xpose.msra.mxu0 0
    %1603 = vmatprep.subr.bf16.mxu0 0
    %1604 = vmatpush1.bf16.xpose.msra.mxu0 0
    %1605 = vmatprep.subr.bf16.mxu0 0
    %1606 = vmatpush1.bf16.xpose.msra.mxu0 0
    %1607 = vmatprep.subr.bf16.mxu0 0
    %1608 = vmatpush1.bf16.xpose.msra.mxu0 0
    %1609 = vmatprep.subr.bf16.mxu0 0
    %1610 = vmatpush1.bf16.xpose.msra.mxu0 0
    %1611 = vmatprep.subr.bf16.mxu0 0
    %1612 = vmatpush1.bf16.xpose.msra.mxu0 0
    %1613 = vmatprep.subr.bf16.mxu0 0
    %1614 = vmatpush1.bf16.xpose.msra.mxu0 0
    %1615 = vmatprep.subr.bf16.mxu0 0
    %1616 = vmatpush1.bf16.xpose.msra.mxu0 0
    %1617 = vmatprep.subr.bf16.mxu0 0
    %1618 = vmatpush1.bf16.xpose.msra.mxu0 0
    %1619 = vmatprep.subr.bf16.mxu0 0
    %1620 = vmatpush1.bf16.xpose.msra.mxu0 0
    %1621 = vmatprep.mubr.bf16.mxu0 %v842
    %1622 = vmatmul.mubr.bf16.gmra.mrb[0].mxu0 %v841
    %v1623 = vpop.f32.mrb[0].mxu0
    %v1624 = vadd.f32 %v1584, %v1623
    %v1625 = vpop.f32.mrb[0].mxu0
    %v1626 = vpop.f32.mrb[0].mxu0
    %v1627 = vpop.f32.mrb[0].mxu0
    %1628 = vdwg.mxu0
    %1629 = vmatprep.subr.bf16.mxu0 %v444
    %1630 = vmatpush1.bf16.xpose.msra.mxu0 %v443
    %1631 = vmatprep.subr.bf16.mxu0 0
    %1632 = vmatpush1.bf16.xpose.msra.mxu0 0
    %1633 = vmatprep.subr.bf16.mxu0 0
    %1634 = vmatpush1.bf16.xpose.msra.mxu0 0
    %1635 = vmatprep.subr.bf16.mxu0 0
    %1636 = vmatpush1.bf16.xpose.msra.mxu0 0
    %1637 = vmatprep.subr.bf16.mxu0 0
    %1638 = vmatpush1.bf16.xpose.msra.mxu0 0
    %1639 = vmatprep.subr.bf16.mxu0 0
    %1640 = vmatpush1.bf16.xpose.msra.mxu0 0
    %1641 = vmatprep.subr.bf16.mxu0 0
    %1642 = vmatpush1.bf16.xpose.msra.mxu0 0
    %1643 = vmatprep.subr.bf16.mxu0 0
    %1644 = vmatpush1.bf16.xpose.msra.mxu0 0
    %1645 = vmatprep.subr.bf16.mxu0 0
    %1646 = vmatpush1.bf16.xpose.msra.mxu0 0
    %1647 = vmatprep.subr.bf16.mxu0 0
    %1648 = vmatpush1.bf16.xpose.msra.mxu0 0
    %1649 = vmatprep.subr.bf16.mxu0 0
    %1650 = vmatpush1.bf16.xpose.msra.mxu0 0
    %1651 = vmatprep.subr.bf16.mxu0 0
    %1652 = vmatpush1.bf16.xpose.msra.mxu0 0
    %1653 = vmatprep.subr.bf16.mxu0 0
    %1654 = vmatpush1.bf16.xpose.msra.mxu0 0
    %1655 = vmatprep.subr.bf16.mxu0 0
    %1656 = vmatpush1.bf16.xpose.msra.mxu0 0
    %1657 = vmatprep.subr.bf16.mxu0 0
    %1658 = vmatpush1.bf16.xpose.msra.mxu0 0
    %1659 = vmatprep.subr.bf16.mxu0 0
    %1660 = vmatpush1.bf16.xpose.msra.mxu0 0
    %1661 = vmatprep.mubr.bf16.mxu0 %v844
    %1662 = vmatmul.mubr.bf16.gmra.mrb[0].mxu0 %v843
    %v1663 = vpop.f32.mrb[0].mxu0
    %v1664 = vadd.f32 %v1624, %v1663
    %v1665 = vpop.f32.mrb[0].mxu0
    %v1666 = vpop.f32.mrb[0].mxu0
    %v1667 = vpop.f32.mrb[0].mxu0
    %1668 = vdwg.mxu0
    %1669 = vmatprep.subr.bf16.mxu0 %v446
    %1670 = vmatpush1.bf16.xpose.msra.mxu0 %v445
    %1671 = vmatprep.subr.bf16.mxu0 0
    %1672 = vmatpush1.bf16.xpose.msra.mxu0 0
    %1673 = vmatprep.subr.bf16.mxu0 0
    %1674 = vmatpush1.bf16.xpose.msra.mxu0 0
    %1675 = vmatprep.subr.bf16.mxu0 0
    %1676 = vmatpush1.bf16.xpose.msra.mxu0 0
    %1677 = vmatprep.subr.bf16.mxu0 0
    %1678 = vmatpush1.bf16.xpose.msra.mxu0 0
    %1679 = vmatprep.subr.bf16.mxu0 0
    %1680 = vmatpush1.bf16.xpose.msra.mxu0 0
    %1681 = vmatprep.subr.bf16.mxu0 0
    %1682 = vmatpush1.bf16.xpose.msra.mxu0 0
    %1683 = vmatprep.subr.bf16.mxu0 0
    %1684 = vmatpush1.bf16.xpose.msra.mxu0 0
    %1685 = vmatprep.subr.bf16.mxu0 0
    %1686 = vmatpush1.bf16.xpose.msra.mxu0 0
    %1687 = vmatprep.subr.bf16.mxu0 0
    %1688 = vmatpush1.bf16.xpose.msra.mxu0 0
    %1689 = vmatprep.subr.bf16.mxu0 0
    %1690 = vmatpush1.bf16.xpose.msra.mxu0 0
    %1691 = vmatprep.subr.bf16.mxu0 0
    %1692 = vmatpush1.bf16.xpose.msra.mxu0 0
    %1693 = vmatprep.subr.bf16.mxu0 0
    %1694 = vmatpush1.bf16.xpose.msra.mxu0 0
    %1695 = vmatprep.subr.bf16.mxu0 0
    %1696 = vmatpush1.bf16.xpose.msra.mxu0 0
    %1697 = vmatprep.subr.bf16.mxu0 0
    %1698 = vmatpush1.bf16.xpose.msra.mxu0 0
    %1699 = vmatprep.subr.bf16.mxu0 0
    %1700 = vmatpush1.bf16.xpose.msra.mxu0 0
    %1701 = vmatprep.mubr.bf16.mxu0 %v846
    %1702 = vmatmul.mubr.bf16.gmra.mrb[0].mxu0 %v845
    %v1703 = vpop.f32.mrb[0].mxu0
    %v1704 = vadd.f32 %v1664, %v1703
    %v1705 = vpop.f32.mrb[0].mxu0
    %v1706 = vpop.f32.mrb[0].mxu0
    %v1707 = vpop.f32.mrb[0].mxu0
    %1708 = vdwg.mxu0
    %1709 = vmatprep.subr.bf16.mxu0 %v448
    %1710 = vmatpush1.bf16.xpose.msra.mxu0 %v447
    %1711 = vmatprep.subr.bf16.mxu0 0
    %1712 = vmatpush1.bf16.xpose.msra.mxu0 0
    %1713 = vmatprep.subr.bf16.mxu0 0
    %1714 = vmatpush1.bf16.xpose.msra.mxu0 0
    %1715 = vmatprep.subr.bf16.mxu0 0
    %1716 = vmatpush1.bf16.xpose.msra.mxu0 0
    %1717 = vmatprep.subr.bf16.mxu0 0
    %1718 = vmatpush1.bf16.xpose.msra.mxu0 0
    %1719 = vmatprep.subr.bf16.mxu0 0
    %1720 = vmatpush1.bf16.xpose.msra.mxu0 0
    %1721 = vmatprep.subr.bf16.mxu0 0
    %1722 = vmatpush1.bf16.xpose.msra.mxu0 0
    %1723 = vmatprep.subr.bf16.mxu0 0
    %1724 = vmatpush1.bf16.xpose.msra.mxu0 0
    %1725 = vmatprep.subr.bf16.mxu0 0
    %1726 = vmatpush1.bf16.xpose.msra.mxu0 0
    %1727 = vmatprep.subr.bf16.mxu0 0
    %1728 = vmatpush1.bf16.xpose.msra.mxu0 0
    %1729 = vmatprep.subr.bf16.mxu0 0
    %1730 = vmatpush1.bf16.xpose.msra.mxu0 0
    %1731 = vmatprep.subr.bf16.mxu0 0
    %1732 = vmatpush1.bf16.xpose.msra.mxu0 0
    %1733 = vmatprep.subr.bf16.mxu0 0
    %1734 = vmatpush1.bf16.xpose.msra.mxu0 0
    %1735 = vmatprep.subr.bf16.mxu0 0
    %1736 = vmatpush1.bf16.xpose.msra.mxu0 0
    %1737 = vmatprep.subr.bf16.mxu0 0
    %1738 = vmatpush1.bf16.xpose.msra.mxu0 0
    %1739 = vmatprep.subr.bf16.mxu0 0
    %1740 = vmatpush1.bf16.xpose.msra.mxu0 0
    %1741 = vmatprep.mubr.bf16.mxu0 %v848
    %1742 = vmatmul.mubr.bf16.gmra.mrb[0].mxu0 %v847
    %v1743 = vpop.f32.mrb[0].mxu0
    %v1744 = vadd.f32 %v1704, %v1743
    %v1745 = vpop.f32.mrb[0].mxu0
    %v1746 = vpop.f32.mrb[0].mxu0
    %v1747 = vpop.f32.mrb[0].mxu0
    %1748 = vdwg.mxu0
    %1749 = vmatprep.subr.bf16.mxu0 %v450
    %1750 = vmatpush1.bf16.xpose.msra.mxu0 %v449
    %1751 = vmatprep.subr.bf16.mxu0 0
    %1752 = vmatpush1.bf16.xpose.msra.mxu0 0
    %1753 = vmatprep.subr.bf16.mxu0 0
    %1754 = vmatpush1.bf16.xpose.msra.mxu0 0
    %1755 = vmatprep.subr.bf16.mxu0 0
    %1756 = vmatpush1.bf16.xpose.msra.mxu0 0
    %1757 = vmatprep.subr.bf16.mxu0 0
    %1758 = vmatpush1.bf16.xpose.msra.mxu0 0
    %1759 = vmatprep.subr.bf16.mxu0 0
    %1760 = vmatpush1.bf16.xpose.msra.mxu0 0
    %1761 = vmatprep.subr.bf16.mxu0 0
    %1762 = vmatpush1.bf16.xpose.msra.mxu0 0
    %1763 = vmatprep.subr.bf16.mxu0 0
    %1764 = vmatpush1.bf16.xpose.msra.mxu0 0
    %1765 = vmatprep.subr.bf16.mxu0 0
    %1766 = vmatpush1.bf16.xpose.msra.mxu0 0
    %1767 = vmatprep.subr.bf16.mxu0 0
    %1768 = vmatpush1.bf16.xpose.msra.mxu0 0
    %1769 = vmatprep.subr.bf16.mxu0 0
    %1770 = vmatpush1.bf16.xpose.msra.mxu0 0
    %1771 = vmatprep.subr.bf16.mxu0 0
    %1772 = vmatpush1.bf16.xpose.msra.mxu0 0
    %1773 = vmatprep.subr.bf16.mxu0 0
    %1774 = vmatpush1.bf16.xpose.msra.mxu0 0
    %1775 = vmatprep.subr.bf16.mxu0 0
    %1776 = vmatpush1.bf16.xpose.msra.mxu0 0
    %1777 = vmatprep.subr.bf16.mxu0 0
    %1778 = vmatpush1.bf16.xpose.msra.mxu0 0
    %1779 = vmatprep.subr.bf16.mxu0 0
    %1780 = vmatpush1.bf16.xpose.msra.mxu0 0
    %1781 = vmatprep.mubr.bf16.mxu0 %v850
    %1782 = vmatmul.mubr.bf16.gmra.mrb[0].mxu0 %v849
    %v1783 = vpop.f32.mrb[0].mxu0
    %v1784 = vadd.f32 %v1744, %v1783
    %v1785 = vpop.f32.mrb[0].mxu0
    %v1786 = vpop.f32.mrb[0].mxu0
    %v1787 = vpop.f32.mrb[0].mxu0
    %1788 = vdwg.mxu0
    %1789 = vmatprep.subr.bf16.mxu0 %v452
    %1790 = vmatpush1.bf16.xpose.msra.mxu0 %v451
    %1791 = vmatprep.subr.bf16.mxu0 0
    %1792 = vmatpush1.bf16.xpose.msra.mxu0 0
    %1793 = vmatprep.subr.bf16.mxu0 0
    %1794 = vmatpush1.bf16.xpose.msra.mxu0 0
    %1795 = vmatprep.subr.bf16.mxu0 0
    %1796 = vmatpush1.bf16.xpose.msra.mxu0 0
    %1797 = vmatprep.subr.bf16.mxu0 0
    %1798 = vmatpush1.bf16.xpose.msra.mxu0 0
    %1799 = vmatprep.subr.bf16.mxu0 0
    %1800 = vmatpush1.bf16.xpose.msra.mxu0 0
    %1801 = vmatprep.subr.bf16.mxu0 0
    %1802 = vmatpush1.bf16.xpose.msra.mxu0 0
    %1803 = vmatprep.subr.bf16.mxu0 0
    %1804 = vmatpush1.bf16.xpose.msra.mxu0 0
    %1805 = vmatprep.subr.bf16.mxu0 0
    %1806 = vmatpush1.bf16.xpose.msra.mxu0 0
    %1807 = vmatprep.subr.bf16.mxu0 0
    %1808 = vmatpush1.bf16.xpose.msra.mxu0 0
    %1809 = vmatprep.subr.bf16.mxu0 0
    %1810 = vmatpush1.bf16.xpose.msra.mxu0 0
    %1811 = vmatprep.subr.bf16.mxu0 0
    %1812 = vmatpush1.bf16.xpose.msra.mxu0 0
    %1813 = vmatprep.subr.bf16.mxu0 0
    %1814 = vmatpush1.bf16.xpose.msra.mxu0 0
    %1815 = vmatprep.subr.bf16.mxu0 0
    %1816 = vmatpush1.bf16.xpose.msra.mxu0 0
    %1817 = vmatprep.subr.bf16.mxu0 0
    %1818 = vmatpush1.bf16.xpose.msra.mxu0 0
    %1819 = vmatprep.subr.bf16.mxu0 0
    %1820 = vmatpush1.bf16.xpose.msra.mxu0 0
    %1821 = vmatprep.mubr.bf16.mxu0 %v852
    %1822 = vmatmul.mubr.bf16.gmra.mrb[0].mxu0 %v851
    %v1823 = vpop.f32.mrb[0].mxu0
    %v1824 = vadd.f32 %v1784, %v1823
    %v1825 = vpop.f32.mrb[0].mxu0
    %v1826 = vpop.f32.mrb[0].mxu0
    %v1827 = vpop.f32.mrb[0].mxu0
    %1828 = vdwg.mxu0
    %1829 = vmatprep.subr.bf16.mxu0 %v454
    %1830 = vmatpush1.bf16.xpose.msra.mxu0 %v453
    %1831 = vmatprep.subr.bf16.mxu0 0
    %1832 = vmatpush1.bf16.xpose.msra.mxu0 0
    %1833 = vmatprep.subr.bf16.mxu0 0
    %1834 = vmatpush1.bf16.xpose.msra.mxu0 0
    %1835 = vmatprep.subr.bf16.mxu0 0
    %1836 = vmatpush1.bf16.xpose.msra.mxu0 0
    %1837 = vmatprep.subr.bf16.mxu0 0
    %1838 = vmatpush1.bf16.xpose.msra.mxu0 0
    %1839 = vmatprep.subr.bf16.mxu0 0
    %1840 = vmatpush1.bf16.xpose.msra.mxu0 0
    %1841 = vmatprep.subr.bf16.mxu0 0
    %1842 = vmatpush1.bf16.xpose.msra.mxu0 0
    %1843 = vmatprep.subr.bf16.mxu0 0
    %1844 = vmatpush1.bf16.xpose.msra.mxu0 0
    %1845 = vmatprep.subr.bf16.mxu0 0
    %1846 = vmatpush1.bf16.xpose.msra.mxu0 0
    %1847 = vmatprep.subr.bf16.mxu0 0
    %1848 = vmatpush1.bf16.xpose.msra.mxu0 0
    %1849 = vmatprep.subr.bf16.mxu0 0
    %1850 = vmatpush1.bf16.xpose.msra.mxu0 0
    %1851 = vmatprep.subr.bf16.mxu0 0
    %1852 = vmatpush1.bf16.xpose.msra.mxu0 0
    %1853 = vmatprep.subr.bf16.mxu0 0
    %1854 = vmatpush1.bf16.xpose.msra.mxu0 0
    %1855 = vmatprep.subr.bf16.mxu0 0
    %1856 = vmatpush1.bf16.xpose.msra.mxu0 0
    %1857 = vmatprep.subr.bf16.mxu0 0
    %1858 = vmatpush1.bf16.xpose.msra.mxu0 0
    %1859 = vmatprep.subr.bf16.mxu0 0
    %1860 = vmatpush1.bf16.xpose.msra.mxu0 0
    %1861 = vmatprep.mubr.bf16.mxu0 %v854
    %1862 = vmatmul.mubr.bf16.gmra.mrb[0].mxu0 %v853
    %v1863 = vpop.f32.mrb[0].mxu0
    %v1864 = vadd.f32 %v1824, %v1863
    %v1865 = vpop.f32.mrb[0].mxu0
    %v1866 = vpop.f32.mrb[0].mxu0
    %v1867 = vpop.f32.mrb[0].mxu0
    %1868 = vdwg.mxu0
    %1869 = vmatprep.subr.bf16.mxu0 %v456
    %1870 = vmatpush1.bf16.xpose.msra.mxu0 %v455
    %1871 = vmatprep.subr.bf16.mxu0 0
    %1872 = vmatpush1.bf16.xpose.msra.mxu0 0
    %1873 = vmatprep.subr.bf16.mxu0 0
    %1874 = vmatpush1.bf16.xpose.msra.mxu0 0
    %1875 = vmatprep.subr.bf16.mxu0 0
    %1876 = vmatpush1.bf16.xpose.msra.mxu0 0
    %1877 = vmatprep.subr.bf16.mxu0 0
    %1878 = vmatpush1.bf16.xpose.msra.mxu0 0
    %1879 = vmatprep.subr.bf16.mxu0 0
    %1880 = vmatpush1.bf16.xpose.msra.mxu0 0
    %1881 = vmatprep.subr.bf16.mxu0 0
    %1882 = vmatpush1.bf16.xpose.msra.mxu0 0
    %1883 = vmatprep.subr.bf16.mxu0 0
    %1884 = vmatpush1.bf16.xpose.msra.mxu0 0
    %1885 = vmatprep.subr.bf16.mxu0 0
    %1886 = vmatpush1.bf16.xpose.msra.mxu0 0
    %1887 = vmatprep.subr.bf16.mxu0 0
    %1888 = vmatpush1.bf16.xpose.msra.mxu0 0
    %1889 = vmatprep.subr.bf16.mxu0 0
    %1890 = vmatpush1.bf16.xpose.msra.mxu0 0
    %1891 = vmatprep.subr.bf16.mxu0 0
    %1892 = vmatpush1.bf16.xpose.msra.mxu0 0
    %1893 = vmatprep.subr.bf16.mxu0 0
    %1894 = vmatpush1.bf16.xpose.msra.mxu0 0
    %1895 = vmatprep.subr.bf16.mxu0 0
    %1896 = vmatpush1.bf16.xpose.msra.mxu0 0
    %1897 = vmatprep.subr.bf16.mxu0 0
    %1898 = vmatpush1.bf16.xpose.msra.mxu0 0
    %1899 = vmatprep.subr.bf16.mxu0 0
    %1900 = vmatpush1.bf16.xpose.msra.mxu0 0
    %1901 = vmatprep.mubr.bf16.mxu0 %v856
    %1902 = vmatmul.mubr.bf16.gmra.mrb[0].mxu0 %v855
    %v1903 = vpop.f32.mrb[0].mxu0
    %v1904 = vadd.f32 %v1864, %v1903
    %v1905 = vpop.f32.mrb[0].mxu0
    %v1906 = vpop.f32.mrb[0].mxu0
    %v1907 = vpop.f32.mrb[0].mxu0
    %1908 = vdwg.mxu0
    %1909 = vmatprep.subr.bf16.mxu0 %v458
    %1910 = vmatpush1.bf16.xpose.msra.mxu0 %v457
    %1911 = vmatprep.subr.bf16.mxu0 0
    %1912 = vmatpush1.bf16.xpose.msra.mxu0 0
    %1913 = vmatprep.subr.bf16.mxu0 0
    %1914 = vmatpush1.bf16.xpose.msra.mxu0 0
    %1915 = vmatprep.subr.bf16.mxu0 0
    %1916 = vmatpush1.bf16.xpose.msra.mxu0 0
    %1917 = vmatprep.subr.bf16.mxu0 0
    %1918 = vmatpush1.bf16.xpose.msra.mxu0 0
    %1919 = vmatprep.subr.bf16.mxu0 0
    %1920 = vmatpush1.bf16.xpose.msra.mxu0 0
    %1921 = vmatprep.subr.bf16.mxu0 0
    %1922 = vmatpush1.bf16.xpose.msra.mxu0 0
    %1923 = vmatprep.subr.bf16.mxu0 0
    %1924 = vmatpush1.bf16.xpose.msra.mxu0 0
    %1925 = vmatprep.subr.bf16.mxu0 0
    %1926 = vmatpush1.bf16.xpose.msra.mxu0 0
    %1927 = vmatprep.subr.bf16.mxu0 0
    %1928 = vmatpush1.bf16.xpose.msra.mxu0 0
    %1929 = vmatprep.subr.bf16.mxu0 0
    %1930 = vmatpush1.bf16.xpose.msra.mxu0 0
    %1931 = vmatprep.subr.bf16.mxu0 0
    %1932 = vmatpush1.bf16.xpose.msra.mxu0 0
    %1933 = vmatprep.subr.bf16.mxu0 0
    %1934 = vmatpush1.bf16.xpose.msra.mxu0 0
    %1935 = vmatprep.subr.bf16.mxu0 0
    %1936 = vmatpush1.bf16.xpose.msra.mxu0 0
    %1937 = vmatprep.subr.bf16.mxu0 0
    %1938 = vmatpush1.bf16.xpose.msra.mxu0 0
    %1939 = vmatprep.subr.bf16.mxu0 0
    %1940 = vmatpush1.bf16.xpose.msra.mxu0 0
    %1941 = vmatprep.mubr.bf16.mxu0 %v858
    %1942 = vmatmul.mubr.bf16.gmra.mrb[0].mxu0 %v857
    %v1943 = vpop.f32.mrb[0].mxu0
    %v1944 = vadd.f32 %v1904, %v1943
    %v1945 = vpop.f32.mrb[0].mxu0
    %v1946 = vpop.f32.mrb[0].mxu0
    %v1947 = vpop.f32.mrb[0].mxu0
    %1948 = vdwg.mxu0
    %1949 = vmatprep.subr.bf16.mxu0 %v460
    %1950 = vmatpush1.bf16.xpose.msra.mxu0 %v459
    %1951 = vmatprep.subr.bf16.mxu0 0
    %1952 = vmatpush1.bf16.xpose.msra.mxu0 0
    %1953 = vmatprep.subr.bf16.mxu0 0
    %1954 = vmatpush1.bf16.xpose.msra.mxu0 0
    %1955 = vmatprep.subr.bf16.mxu0 0
    %1956 = vmatpush1.bf16.xpose.msra.mxu0 0
    %1957 = vmatprep.subr.bf16.mxu0 0
    %1958 = vmatpush1.bf16.xpose.msra.mxu0 0
    %1959 = vmatprep.subr.bf16.mxu0 0
    %1960 = vmatpush1.bf16.xpose.msra.mxu0 0
    %1961 = vmatprep.subr.bf16.mxu0 0
    %1962 = vmatpush1.bf16.xpose.msra.mxu0 0
    %1963 = vmatprep.subr.bf16.mxu0 0
    %1964 = vmatpush1.bf16.xpose.msra.mxu0 0
    %1965 = vmatprep.subr.bf16.mxu0 0
    %1966 = vmatpush1.bf16.xpose.msra.mxu0 0
    %1967 = vmatprep.subr.bf16.mxu0 0
    %1968 = vmatpush1.bf16.xpose.msra.mxu0 0
    %1969 = vmatprep.subr.bf16.mxu0 0
    %1970 = vmatpush1.bf16.xpose.msra.mxu0 0
    %1971 = vmatprep.subr.bf16.mxu0 0
    %1972 = vmatpush1.bf16.xpose.msra.mxu0 0
    %1973 = vmatprep.subr.bf16.mxu0 0
    %1974 = vmatpush1.bf16.xpose.msra.mxu0 0
    %1975 = vmatprep.subr.bf16.mxu0 0
    %1976 = vmatpush1.bf16.xpose.msra.mxu0 0
    %1977 = vmatprep.subr.bf16.mxu0 0
    %1978 = vmatpush1.bf16.xpose.msra.mxu0 0
    %1979 = vmatprep.subr.bf16.mxu0 0
    %1980 = vmatpush1.bf16.xpose.msra.mxu0 0
    %1981 = vmatprep.mubr.bf16.mxu0 %v860
    %1982 = vmatmul.mubr.bf16.gmra.mrb[0].mxu0 %v859
    %v1983 = vpop.f32.mrb[0].mxu0
    %v1984 = vadd.f32 %v1944, %v1983
    %v1985 = vpop.f32.mrb[0].mxu0
    %v1986 = vpop.f32.mrb[0].mxu0
    %v1987 = vpop.f32.mrb[0].mxu0
    %1988 = vdwg.mxu0
    %1989 = vmatprep.subr.bf16.mxu0 %v462
    %1990 = vmatpush1.bf16.xpose.msra.mxu0 %v461
    %1991 = vmatprep.subr.bf16.mxu0 0
    %1992 = vmatpush1.bf16.xpose.msra.mxu0 0
    %1993 = vmatprep.subr.bf16.mxu0 0
    %1994 = vmatpush1.bf16.xpose.msra.mxu0 0
    %1995 = vmatprep.subr.bf16.mxu0 0
    %1996 = vmatpush1.bf16.xpose.msra.mxu0 0
    %1997 = vmatprep.subr.bf16.mxu0 0
    %1998 = vmatpush1.bf16.xpose.msra.mxu0 0
    %1999 = vmatprep.subr.bf16.mxu0 0
    %2000 = vmatpush1.bf16.xpose.msra.mxu0 0
    %2001 = vmatprep.subr.bf16.mxu0 0
    %2002 = vmatpush1.bf16.xpose.msra.mxu0 0
    %2003 = vmatprep.subr.bf16.mxu0 0
    %2004 = vmatpush1.bf16.xpose.msra.mxu0 0
    %2005 = vmatprep.subr.bf16.mxu0 0
    %2006 = vmatpush1.bf16.xpose.msra.mxu0 0
    %2007 = vmatprep.subr.bf16.mxu0 0
    %2008 = vmatpush1.bf16.xpose.msra.mxu0 0
    %2009 = vmatprep.subr.bf16.mxu0 0
    %2010 = vmatpush1.bf16.xpose.msra.mxu0 0
    %2011 = vmatprep.subr.bf16.mxu0 0
    %2012 = vmatpush1.bf16.xpose.msra.mxu0 0
    %2013 = vmatprep.subr.bf16.mxu0 0
    %2014 = vmatpush1.bf16.xpose.msra.mxu0 0
    %2015 = vmatprep.subr.bf16.mxu0 0
    %2016 = vmatpush1.bf16.xpose.msra.mxu0 0
    %2017 = vmatprep.subr.bf16.mxu0 0
    %2018 = vmatpush1.bf16.xpose.msra.mxu0 0
    %2019 = vmatprep.subr.bf16.mxu0 0
    %2020 = vmatpush1.bf16.xpose.msra.mxu0 0
    %2021 = vmatprep.mubr.bf16.mxu0 %v862
    %2022 = vmatmul.mubr.bf16.gmra.mrb[0].mxu0 %v861
    %v2023 = vpop.f32.mrb[0].mxu0
    %v2024 = vadd.f32 %v1984, %v2023
    %v2025 = vpop.f32.mrb[0].mxu0
    %v2026 = vpop.f32.mrb[0].mxu0
    %v2027 = vpop.f32.mrb[0].mxu0
    %2028 = vdwg.mxu0
    %2029 = vmatprep.subr.bf16.mxu0 %v464
    %2030 = vmatpush1.bf16.xpose.msra.mxu0 %v463
    %2031 = vmatprep.subr.bf16.mxu0 0
    %2032 = vmatpush1.bf16.xpose.msra.mxu0 0
    %2033 = vmatprep.subr.bf16.mxu0 0
    %2034 = vmatpush1.bf16.xpose.msra.mxu0 0
    %2035 = vmatprep.subr.bf16.mxu0 0
    %2036 = vmatpush1.bf16.xpose.msra.mxu0 0
    %2037 = vmatprep.subr.bf16.mxu0 0
    %2038 = vmatpush1.bf16.xpose.msra.mxu0 0
    %2039 = vmatprep.subr.bf16.mxu0 0
    %2040 = vmatpush1.bf16.xpose.msra.mxu0 0
    %2041 = vmatprep.subr.bf16.mxu0 0
    %2042 = vmatpush1.bf16.xpose.msra.mxu0 0
    %2043 = vmatprep.subr.bf16.mxu0 0
    %2044 = vmatpush1.bf16.xpose.msra.mxu0 0
    %2045 = vmatprep.subr.bf16.mxu0 0
    %2046 = vmatpush1.bf16.xpose.msra.mxu0 0
    %2047 = vmatprep.subr.bf16.mxu0 0
    %2048 = vmatpush1.bf16.xpose.msra.mxu0 0
    %2049 = vmatprep.subr.bf16.mxu0 0
    %2050 = vmatpush1.bf16.xpose.msra.mxu0 0
    %2051 = vmatprep.subr.bf16.mxu0 0
    %2052 = vmatpush1.bf16.xpose.msra.mxu0 0
    %2053 = vmatprep.subr.bf16.mxu0 0
    %2054 = vmatpush1.bf16.xpose.msra.mxu0 0
    %2055 = vmatprep.subr.bf16.mxu0 0
    %2056 = vmatpush1.bf16.xpose.msra.mxu0 0
    %2057 = vmatprep.subr.bf16.mxu0 0
    %2058 = vmatpush1.bf16.xpose.msra.mxu0 0
    %2059 = vmatprep.subr.bf16.mxu0 0
    %2060 = vmatpush1.bf16.xpose.msra.mxu0 0
    %2061 = vmatprep.mubr.bf16.mxu0 %v864
    %2062 = vmatmul.mubr.bf16.gmra.mrb[0].mxu0 %v863
    %v2063 = vpop.f32.mrb[0].mxu0
    %v2064 = vadd.f32 %v2024, %v2063
    %v2065 = vpop.f32.mrb[0].mxu0
    %v2066 = vpop.f32.mrb[0].mxu0
    %v2067 = vpop.f32.mrb[0].mxu0
    %2068 = vdwg.mxu0
    %2069 = vmatprep.subr.bf16.mxu0 %v466
    %2070 = vmatpush1.bf16.xpose.msra.mxu0 %v465
    %2071 = vmatprep.subr.bf16.mxu0 0
    %2072 = vmatpush1.bf16.xpose.msra.mxu0 0
    %2073 = vmatprep.subr.bf16.mxu0 0
    %2074 = vmatpush1.bf16.xpose.msra.mxu0 0
    %2075 = vmatprep.subr.bf16.mxu0 0
    %2076 = vmatpush1.bf16.xpose.msra.mxu0 0
    %2077 = vmatprep.subr.bf16.mxu0 0
    %2078 = vmatpush1.bf16.xpose.msra.mxu0 0
    %2079 = vmatprep.subr.bf16.mxu0 0
    %2080 = vmatpush1.bf16.xpose.msra.mxu0 0
    %2081 = vmatprep.subr.bf16.mxu0 0
    %2082 = vmatpush1.bf16.xpose.msra.mxu0 0
    %2083 = vmatprep.subr.bf16.mxu0 0
    %2084 = vmatpush1.bf16.xpose.msra.mxu0 0
    %2085 = vmatprep.subr.bf16.mxu0 0
    %2086 = vmatpush1.bf16.xpose.msra.mxu0 0
    %2087 = vmatprep.subr.bf16.mxu0 0
    %2088 = vmatpush1.bf16.xpose.msra.mxu0 0
    %2089 = vmatprep.subr.bf16.mxu0 0
    %2090 = vmatpush1.bf16.xpose.msra.mxu0 0
    %2091 = vmatprep.subr.bf16.mxu0 0
    %2092 = vmatpush1.bf16.xpose.msra.mxu0 0
    %2093 = vmatprep.subr.bf16.mxu0 0
    %2094 = vmatpush1.bf16.xpose.msra.mxu0 0
    %2095 = vmatprep.subr.bf16.mxu0 0
    %2096 = vmatpush1.bf16.xpose.msra.mxu0 0
    %2097 = vmatprep.subr.bf16.mxu0 0
    %2098 = vmatpush1.bf16.xpose.msra.mxu0 0
    %2099 = vmatprep.subr.bf16.mxu0 0
    %2100 = vmatpush1.bf16.xpose.msra.mxu0 0
    %2101 = vmatprep.mubr.bf16.mxu0 %v866
    %2102 = vmatmul.mubr.bf16.gmra.mrb[0].mxu0 %v865
    %v2103 = vpop.f32.mrb[0].mxu0
    %v2104 = vadd.f32 %v2064, %v2103
    %v2105 = vpop.f32.mrb[0].mxu0
    %v2106 = vpop.f32.mrb[0].mxu0
    %v2107 = vpop.f32.mrb[0].mxu0
    %2108 = vdwg.mxu0
    %2109 = vmatprep.subr.bf16.mxu0 %v468
    %2110 = vmatpush1.bf16.xpose.msra.mxu0 %v467
    %2111 = vmatprep.subr.bf16.mxu0 0
    %2112 = vmatpush1.bf16.xpose.msra.mxu0 0
    %2113 = vmatprep.subr.bf16.mxu0 0
    %2114 = vmatpush1.bf16.xpose.msra.mxu0 0
    %2115 = vmatprep.subr.bf16.mxu0 0
    %2116 = vmatpush1.bf16.xpose.msra.mxu0 0
    %2117 = vmatprep.subr.bf16.mxu0 0
    %2118 = vmatpush1.bf16.xpose.msra.mxu0 0
    %2119 = vmatprep.subr.bf16.mxu0 0
    %2120 = vmatpush1.bf16.xpose.msra.mxu0 0
    %2121 = vmatprep.subr.bf16.mxu0 0
    %2122 = vmatpush1.bf16.xpose.msra.mxu0 0
    %2123 = vmatprep.subr.bf16.mxu0 0
    %2124 = vmatpush1.bf16.xpose.msra.mxu0 0
    %2125 = vmatprep.subr.bf16.mxu0 0
    %2126 = vmatpush1.bf16.xpose.msra.mxu0 0
    %2127 = vmatprep.subr.bf16.mxu0 0
    %2128 = vmatpush1.bf16.xpose.msra.mxu0 0
    %2129 = vmatprep.subr.bf16.mxu0 0
    %2130 = vmatpush1.bf16.xpose.msra.mxu0 0
    %2131 = vmatprep.subr.bf16.mxu0 0
    %2132 = vmatpush1.bf16.xpose.msra.mxu0 0
    %2133 = vmatprep.subr.bf16.mxu0 0
    %2134 = vmatpush1.bf16.xpose.msra.mxu0 0
    %2135 = vmatprep.subr.bf16.mxu0 0
    %2136 = vmatpush1.bf16.xpose.msra.mxu0 0
    %2137 = vmatprep.subr.bf16.mxu0 0
    %2138 = vmatpush1.bf16.xpose.msra.mxu0 0
    %2139 = vmatprep.subr.bf16.mxu0 0
    %2140 = vmatpush1.bf16.xpose.msra.mxu0 0
    %2141 = vmatprep.mubr.bf16.mxu0 %v868
    %2142 = vmatmul.mubr.bf16.gmra.mrb[0].mxu0 %v867
    %v2143 = vpop.f32.mrb[0].mxu0
    %v2144 = vadd.f32 %v2104, %v2143
    %v2145 = vpop.f32.mrb[0].mxu0
    %v2146 = vpop.f32.mrb[0].mxu0
    %v2147 = vpop.f32.mrb[0].mxu0
    %2148 = vdwg.mxu0
    %v2149 = vsub.f32 0.0, %v2144
    %v2150 = vmul.f32 %v2149, 1.442695
    %v2151 = vpow.pop %v2150
    %v2152 = vadd.f32 %v2151, 1.0
    %v2153 = vrcp.pop %v2152
    %v2154 = vmul.f32 1.0, %v2153
    %vm2155 = vcmask 8192
    %2156 = vst.msk [vmem:[#allocation7] sm:$0x1] %vm2155, %v2154
    // Predicated region
    $region18: #{tpu_custom_call.1} parent=1 // pred_check
      _
    $region19: #{tpu_custom_call.1} parent=1 // pred_check_branch
      %2158 = sbr.rel (0) target = $region21
    $region20: #{tpu_custom_call.1} parent=1 // pred_region
      %s2160 = ssub.s32 16, 16
      %2161 = vsyncadd [#allocation4], %s2160
      %s2163 = sshll.u32 [#allocation7], 4
      %s2164 = int_to_ptr.vmem [resolvable:$true] %s2163
      %2166 = dma.vmem_to_hbm [thread:$0]  %s2164, 16, %s2, [#allocation4]
    $region21: #{tpu_custom_call.1} parent=1 // pred_fallthru
      _
    // Predicated region
    $region22: #{tpu_custom_call.1} parent=1 // pred_check
      _
    $region23: #{tpu_custom_call.1} parent=1 // pred_check_branch
      %2168 = sbr.rel (0) target = $region25
    $region24: #{tpu_custom_call.1} parent=1 // pred_region
      %2169 = dma.done [#allocation4], 16
    $region25: #{tpu_custom_call.1} parent=1 // pred_fallthru
      _
    %2170 = vsyncpa [#allocation3], 1
    %2171 = vsyncpa [#allocation6], 1
    %2172 = vsyncpa [#allocation4], 1

</llo_original>
